<compile_context>
chip_gen: v5e
topology: v5e:2x2
jax: 0.10.0
libtpu: 0.0.40
codegen_flags: <defaults>
</compile_context>

<pallas_src>
import functools

import jax
import jax.numpy as jnp
from jax.experimental import pallas as pl
from jax.experimental.pallas import tpu as pltpu

LATENT = 64
MAX_BLOCK_B = 512   # rows per batch tile; footprint at d_pad=256 is only a few MB


def _round_up(x, m):
    return (x + m - 1) // m * m


def _vae_kernel(
    x_ref, eps_ref,
    w1_ref, b1_ref, w2_ref, b2_ref,
    whead_ref, bhead_ref,
    wd1_ref, bd1_ref, wd2_ref, bd2_ref, wd3_ref, bd3_ref,
    rebuilt_ref, mulv_ref,
):
    bf16 = jnp.bfloat16

    # ---- encoder: Linear(D,512) -> ReLU -> Linear(512,256) -> ReLU ----
    x = x_ref[...]                                   # already bf16 from the wrapper
    h1 = jnp.dot(x, w1_ref[...], preferred_element_type=jnp.float32) + b1_ref[...]
    h1 = jnp.maximum(h1, 0.0).astype(bf16)
    h2 = jnp.dot(h1, w2_ref[...], preferred_element_type=jnp.float32) + b2_ref[...]
    h2 = jnp.maximum(h2, 0.0).astype(bf16)

    # ---- fused latent heads: one (256,128) matmul, lanes [0:64]=mu, [64:128]=logvar ----
    head = jnp.dot(h2, whead_ref[...], preferred_element_type=jnp.float32) + bhead_ref[...]
    mu = head[:, :LATENT]
    logvar = head[:, LATENT:]

    # ---- reparameterize (f32 epilogue): z = mu + eps * exp(0.5*logvar) ----
    std = jnp.exp(0.5 * logvar)
    z = (mu + eps_ref[...] * std).astype(bf16)

    # ---- decoder: Linear(64,256) -> ReLU -> Linear(256,512) -> ReLU -> Linear(512,D) -> Tanh ----
    d1 = jnp.dot(z, wd1_ref[...], preferred_element_type=jnp.float32) + bd1_ref[...]
    d1 = jnp.maximum(d1, 0.0).astype(bf16)
    d2 = jnp.dot(d1, wd2_ref[...], preferred_element_type=jnp.float32) + bd2_ref[...]
    d2 = jnp.maximum(d2, 0.0).astype(bf16)
    d3 = jnp.dot(d2, wd3_ref[...], preferred_element_type=jnp.float32) + bd3_ref[...]

    rebuilt_ref[...] = jnp.tanh(d3).astype(rebuilt_ref.dtype)   # bf16 lane-dense store
    mulv_ref[...] = head.astype(mulv_ref.dtype)                 # (B,128) store; split in wrapper


def init_vae_params(key, img_size):
    """Deterministic init matching PyTorch nn.Linear shapes (weights stored as (in, out), f32)."""
    d = img_size ** 2
    dims = [
        ("enc1", d, 512), ("enc2", 512, 256),
        ("mu", 256, LATENT), ("logvar", 256, LATENT),
        ("dec1", LATENT, 256), ("dec2", 256, 512), ("dec3", 512, d),
    ]
    params = {}
    for name, fan_in, fan_out in dims:
        key, kw, kb = jax.random.split(key, 3)
        bound = 1.0 / jnp.sqrt(fan_in)
        # PyTorch Linear stores W as (out, in); we store the transpose (in, out).
        params[name + "_w"] = jax.random.uniform(kw, (fan_in, fan_out), jnp.float32, -bound, bound)
        params[name + "_b"] = jax.random.uniform(kb, (1, fan_out), jnp.float32, -bound, bound)
    return params


def prepare_kernel_params(params, img_size):
    """One-time prep: fuse mu/logvar head, pad D to a multiple of 128, cast weights to bf16."""
    d = img_size ** 2
    d_pad = _round_up(d, 128)
    bf16 = jnp.bfloat16

    w1 = params["enc1_w"]
    if d_pad != d:  # zero rows contribute nothing to x_pad @ w1
        w1 = jnp.pad(w1, ((0, d_pad - d), (0, 0)))
    wd3 = params["dec3_w"]
    bd3 = params["dec3_b"]
    if d_pad != d:  # padded output cols are sliced off in the wrapper
        wd3 = jnp.pad(wd3, ((0, 0), (0, d_pad - d)))
        bd3 = jnp.pad(bd3, ((0, 0), (0, d_pad - d)))

    return {
        "w1": w1.astype(bf16), "b1": params["enc1_b"],
        "w2": params["enc2_w"].astype(bf16), "b2": params["enc2_b"],
        "whead": jnp.concatenate([params["mu_w"], params["logvar_w"]], axis=1).astype(bf16),
        "bhead": jnp.concatenate([params["mu_b"], params["logvar_b"]], axis=1),
        "wd1": params["dec1_w"].astype(bf16), "bd1": params["dec1_b"],
        "wd2": params["dec2_w"].astype(bf16), "bd2": params["dec2_b"],
        "wd3": wd3.astype(bf16), "bd3": bd3,
    }


@functools.partial(jax.jit, static_argnames=("img_size",))
def vae_forward(x_nchw, eps, kparams, img_size):
    b = x_nchw.shape[0]
    d = img_size ** 2
    d_pad = _round_up(d, 128)

    # Batch tiling: 16-aligned (bf16 sublane packing).  Large tiles amortize the fixed
    # per-grid-step cost; >=2 tiles whenever possible so v7x's two TensorCores both get work.
    b16 = _round_up(b, 16)
    if b16 <= 32:
        block_b = b16
        b_pad = b16
    else:
        block_b = min(MAX_BLOCK_B, _round_up(pl.cdiv(b16, 2), 16))
        b_pad = _round_up(b16, block_b)
    grid = (b_pad // block_b,)

    # x.view(x.size(0), -1): reshape + bf16 cast (+ pad only when needed); XLA fuses these.
    x = x_nchw.reshape(b, -1).astype(jnp.bfloat16)
    if b_pad != b or d_pad != d:
        x = jnp.pad(x, ((0, b_pad - b), (0, d_pad - d)))
    eps_p = eps if b_pad == b else jnp.pad(eps, ((0, b_pad - b), (0, 0)))

    def resident(shape):
        # Same block every grid step -> stays in VMEM; single-buffered (no point double-buffering
        # a block that never changes), which halves weight VMEM (matters on v7x's 64 MiB).
        return pl.BlockSpec(shape, lambda i: (0,) * len(shape), pipeline_mode=pl.Buffered(1))

    in_specs = [
        pl.BlockSpec((block_b, d_pad), lambda i: (i, 0)),   # x (bf16)
        pl.BlockSpec((block_b, LATENT), lambda i: (i, 0)),  # eps (f32, full 64-lane extent)
        resident((d_pad, 512)), resident((1, 512)),
        resident((512, 256)), resident((1, 256)),
        resident((256, 2 * LATENT)), resident((1, 2 * LATENT)),
        resident((LATENT, 256)), resident((1, 256)),
        resident((256, 512)), resident((1, 512)),
        resident((512, d_pad)), resident((1, d_pad)),
    ]
    out_specs = (
        pl.BlockSpec((block_b, d_pad), lambda i: (i, 0)),        # rebuilt (bf16)
        pl.BlockSpec((block_b, 2 * LATENT), lambda i: (i, 0)),   # [mu | logvar] (f32)
    )

    mm = d_pad * 512 + 512 * 256 + 256 * 2 * LATENT + LATENT * 256 + 256 * 512 + 512 * d_pad
    cost = pl.CostEstimate(
        flops=2 * b_pad * mm,
        transcendentals=b_pad * (LATENT + d_pad),                # exp(std) + tanh
        bytes_accessed=2 * mm                                    # bf16 weights
        + 4 * (512 + 256 + 2 * LATENT + 256 + 512 + d_pad)       # f32 biases
        + 2 * b_pad * d_pad + 4 * b_pad * LATENT                 # x (bf16) + eps (f32)
        + 2 * b_pad * d_pad + 4 * b_pad * 2 * LATENT,            # rebuilt (bf16) + mu/logvar (f32)
    )

    rebuilt, mulv = pl.pallas_call(
        _vae_kernel,
        grid=grid,
        in_specs=in_specs,
        out_specs=out_specs,
        out_shape=(
            jax.ShapeDtypeStruct((b_pad, d_pad), jnp.bfloat16),
            jax.ShapeDtypeStruct((b_pad, 2 * LATENT), jnp.float32),
        ),
        compiler_params=pltpu.CompilerParams(dimension_semantics=("parallel",)),
        cost_estimate=cost,
    )(
        x, eps_p,
        kparams["w1"], kparams["b1"], kparams["w2"], kparams["b2"],
        kparams["whead"], kparams["bhead"],
        kparams["wd1"], kparams["bd1"], kparams["wd2"], kparams["bd2"],
        kparams["wd3"], kparams["bd3"],
    )

    rebuilt = rebuilt[:b, :d].astype(jnp.float32)
    mu = mulv[:b, :LATENT]
    logvar = mulv[:b, LATENT:]
    return rebuilt, mu, logvar


def vae_forward_ref(x_nchw, eps, params):
    """Pure-JAX reference mirroring the kernel's bf16-operand / f32-accumulate matmuls."""
    bf16 = jnp.bfloat16

    def dot(a, w):
        return jnp.dot(a.astype(bf16), w.astype(bf16), preferred_element_type=jnp.float32)

    b = x_nchw.shape[0]
    x = x_nchw.reshape(b, -1)
    h1 = jnp.maximum(dot(x, params["enc1_w"]) + params["enc1_b"], 0.0)
    h2 = jnp.maximum(dot(h1, params["enc2_w"]) + params["enc2_b"], 0.0)
    mu = dot(h2, params["mu_w"]) + params["mu_b"]
    logvar = dot(h2, params["logvar_w"]) + params["logvar_b"]
    z = mu + eps * jnp.exp(0.5 * logvar)
    d1 = jnp.maximum(dot(z, params["dec1_w"]) + params["dec1_b"], 0.0)
    d2 = jnp.maximum(dot(d1, params["dec2_w"]) + params["dec2_b"], 0.0)
    rebuilt = jnp.tanh(dot(d2, params["dec3_w"]) + params["dec3_b"])
    return rebuilt, mu, logvar


if __name__ == "__main__":
    img_size = 16       # img_size**2 = 256 input features (lane-aligned)
    batch = 8
    key = jax.random.PRNGKey(0)
    k_params, k_x, k_eps = jax.random.split(key, 3)

    params = init_vae_params(k_params, img_size)
    kparams = prepare_kernel_params(params, img_size)     # bf16 / fused-head / padded, done once

    x = jax.random.normal(k_x, (batch, 1, img_size, img_size), jnp.float32)  # NCHW
    eps = jax.random.normal(k_eps, (batch, LATENT), jnp.float32)             # reparam noise

    rebuilt, mu, logvar = vae_forward(x, eps, kparams, img_size)
    jax.block_until_ready((rebuilt, mu, logvar))

    # correctness check against pure-JAX reference (bf16 matmuls / bf16 output => looser tolerance)
    r_ref, mu_r, lv_r = vae_forward_ref(x, eps, params)
    assert jnp.allclose(rebuilt, r_ref, atol=2e-2, rtol=2e-2)
    assert jnp.allclose(mu, mu_r, atol=1e-2, rtol=1e-2)
    assert jnp.allclose(logvar, lv_r, atol=1e-2, rtol=1e-2)
    assert rebuilt.shape == (batch, img_size ** 2)
    assert mu.shape == (batch, LATENT) and logvar.shape == (batch, LATENT)

    print("KERNEL_OK")
</pallas_src>

<mosaic_0001>
module attributes {stable_mosaic.version = 11 : i64} {
  func.func @_vae_kernel(%arg0: i32, %arg1: memref<16x256xbf16, #tpu.memory_space<vmem>>, %arg2: memref<16x64xf32, #tpu.memory_space<vmem>>, %arg3: memref<256x512xbf16, #tpu.memory_space<vmem>>, %arg4: memref<1x512xf32, #tpu.memory_space<vmem>>, %arg5: memref<512x256xbf16, #tpu.memory_space<vmem>>, %arg6: memref<1x256xf32, #tpu.memory_space<vmem>>, %arg7: memref<256x128xbf16, #tpu.memory_space<vmem>>, %arg8: memref<1x128xf32, #tpu.memory_space<vmem>>, %arg9: memref<64x256xbf16, #tpu.memory_space<vmem>>, %arg10: memref<1x256xf32, #tpu.memory_space<vmem>>, %arg11: memref<256x512xbf16, #tpu.memory_space<vmem>>, %arg12: memref<1x512xf32, #tpu.memory_space<vmem>>, %arg13: memref<512x256xbf16, #tpu.memory_space<vmem>>, %arg14: memref<1x256xf32, #tpu.memory_space<vmem>>, %arg15: memref<16x256xbf16, #tpu.memory_space<vmem>>, %arg16: memref<16x128xf32, #tpu.memory_space<vmem>>) attributes {dimension_semantics = [#tpu.dimension_semantics<parallel>], iteration_bounds = array<i64: 1>, scalar_prefetch = 0 : i64, scratch_operands = 0 : i64, tpu.core_type = #tpu.core_type<tc>, window_params = [{transform_indices = @transform_0, window_bounds = array<i64: 16, 256>}, {transform_indices = @transform_1, window_bounds = array<i64: 16, 64>}, {pipeline_mode = #tpu.pipeline_mode<synchronous>, transform_indices = @transform_2, window_bounds = array<i64: 256, 512>}, {pipeline_mode = #tpu.pipeline_mode<synchronous>, transform_indices = @transform_3, window_bounds = array<i64: 1, 512>}, {pipeline_mode = #tpu.pipeline_mode<synchronous>, transform_indices = @transform_4, window_bounds = array<i64: 512, 256>}, {pipeline_mode = #tpu.pipeline_mode<synchronous>, transform_indices = @transform_5, window_bounds = array<i64: 1, 256>}, {pipeline_mode = #tpu.pipeline_mode<synchronous>, transform_indices = @transform_6, window_bounds = array<i64: 256, 128>}, {pipeline_mode = #tpu.pipeline_mode<synchronous>, transform_indices = @transform_7, window_bounds = array<i64: 1, 128>}, {pipeline_mode = #tpu.pipeline_mode<synchronous>, transform_indices = @transform_8, window_bounds = array<i64: 64, 256>}, {pipeline_mode = #tpu.pipeline_mode<synchronous>, transform_indices = @transform_9, window_bounds = array<i64: 1, 256>}, {pipeline_mode = #tpu.pipeline_mode<synchronous>, transform_indices = @transform_10, window_bounds = array<i64: 256, 512>}, {pipeline_mode = #tpu.pipeline_mode<synchronous>, transform_indices = @transform_11, window_bounds = array<i64: 1, 512>}, {pipeline_mode = #tpu.pipeline_mode<synchronous>, transform_indices = @transform_12, window_bounds = array<i64: 512, 256>}, {pipeline_mode = #tpu.pipeline_mode<synchronous>, transform_indices = @transform_13, window_bounds = array<i64: 1, 256>}, {transform_indices = @transform_14, window_bounds = array<i64: 16, 256>}, {transform_indices = @transform_15, window_bounds = array<i64: 16, 128>}]} {
    %c0 = arith.constant 0 : index
    %c0_0 = arith.constant 0 : index
    %0 = vector.load %arg1[%c0, %c0_0] : memref<16x256xbf16, #tpu.memory_space<vmem>>, vector<16x256xbf16>
    %c0_1 = arith.constant 0 : index
    %c0_2 = arith.constant 0 : index
    %1 = vector.load %arg3[%c0_1, %c0_2] : memref<256x512xbf16, #tpu.memory_space<vmem>>, vector<256x512xbf16>
    %cst = arith.constant dense<0.000000e+00> : vector<16x512xf32>
    %2 = tpu.matmul %0, %1, %cst {dimension_numbers = #tpu.dot_dimension_numbers<[1], [0], [0], [1], [0, 0, 1, 1], [], []>} : vector<16x256xbf16>, vector<256x512xbf16>, vector<16x512xf32> -> vector<16x512xf32>
    %c0_3 = arith.constant 0 : index
    %c0_4 = arith.constant 0 : index
    %3 = vector.load %arg4[%c0_3, %c0_4] : memref<1x512xf32, #tpu.memory_space<vmem>>, vector<1x512xf32>
    %4 = vector.broadcast %3 : vector<1x512xf32> to vector<16x512xf32>
    %5 = arith.addf %2, %4 : vector<16x512xf32>
    %cst_5 = arith.constant 0.000000e+00 : f32
    %6 = vector.broadcast %cst_5 : f32 to vector<16x512xf32>
    %7 = arith.maximumf %5, %6 : vector<16x512xf32>
    %8 = arith.truncf %7 : vector<16x512xf32> to vector<16x512xbf16>
    %c0_6 = arith.constant 0 : index
    %c0_7 = arith.constant 0 : index
    %9 = vector.load %arg5[%c0_6, %c0_7] : memref<512x256xbf16, #tpu.memory_space<vmem>>, vector<512x256xbf16>
    %cst_8 = arith.constant dense<0.000000e+00> : vector<16x256xf32>
    %10 = tpu.matmul %8, %9, %cst_8 {dimension_numbers = #tpu.dot_dimension_numbers<[1], [0], [0], [1], [0, 0, 1, 1], [], []>} : vector<16x512xbf16>, vector<512x256xbf16>, vector<16x256xf32> -> vector<16x256xf32>
    %c0_9 = arith.constant 0 : index
    %c0_10 = arith.constant 0 : index
    %11 = vector.load %arg6[%c0_9, %c0_10] : memref<1x256xf32, #tpu.memory_space<vmem>>, vector<1x256xf32>
    %12 = vector.broadcast %11 : vector<1x256xf32> to vector<16x256xf32>
    %13 = arith.addf %10, %12 : vector<16x256xf32>
    %cst_11 = arith.constant 0.000000e+00 : f32
    %14 = vector.broadcast %cst_11 : f32 to vector<16x256xf32>
    %15 = arith.maximumf %13, %14 : vector<16x256xf32>
    %16 = arith.truncf %15 : vector<16x256xf32> to vector<16x256xbf16>
    %c0_12 = arith.constant 0 : index
    %c0_13 = arith.constant 0 : index
    %17 = vector.load %arg7[%c0_12, %c0_13] : memref<256x128xbf16, #tpu.memory_space<vmem>>, vector<256x128xbf16>
    %cst_14 = arith.constant dense<0.000000e+00> : vector<16x128xf32>
    %18 = tpu.matmul %16, %17, %cst_14 {dimension_numbers = #tpu.dot_dimension_numbers<[1], [0], [0], [1], [0, 0, 1, 1], [], []>} : vector<16x256xbf16>, vector<256x128xbf16>, vector<16x128xf32> -> vector<16x128xf32>
    %c0_15 = arith.constant 0 : index
    %c0_16 = arith.constant 0 : index
    %19 = vector.load %arg8[%c0_15, %c0_16] : memref<1x128xf32, #tpu.memory_space<vmem>>, vector<1x128xf32>
    %20 = vector.broadcast %19 : vector<1x128xf32> to vector<16x128xf32>
    %21 = arith.addf %18, %20 : vector<16x128xf32>
    %22 = vector.extract_strided_slice %21 {offsets = [0, 0], sizes = [16, 64], strides = [1, 1]} : vector<16x128xf32> to vector<16x64xf32>
    %23 = vector.extract_strided_slice %21 {offsets = [0, 64], sizes = [16, 64], strides = [1, 1]} : vector<16x128xf32> to vector<16x64xf32>
    %cst_17 = arith.constant 5.000000e-01 : f32
    %24 = vector.broadcast %cst_17 : f32 to vector<16x64xf32>
    %25 = arith.mulf %24, %23 : vector<16x64xf32>
    %26 = math.exp %25 : vector<16x64xf32>
    %c0_18 = arith.constant 0 : index
    %c0_19 = arith.constant 0 : index
    %27 = vector.load %arg2[%c0_18, %c0_19] : memref<16x64xf32, #tpu.memory_space<vmem>>, vector<16x64xf32>
    %28 = arith.mulf %27, %26 : vector<16x64xf32>
    %29 = arith.addf %22, %28 : vector<16x64xf32>
    %30 = arith.truncf %29 : vector<16x64xf32> to vector<16x64xbf16>
    %c0_20 = arith.constant 0 : index
    %c0_21 = arith.constant 0 : index
    %31 = vector.load %arg9[%c0_20, %c0_21] : memref<64x256xbf16, #tpu.memory_space<vmem>>, vector<64x256xbf16>
    %cst_22 = arith.constant dense<0.000000e+00> : vector<16x256xf32>
    %32 = tpu.matmul %30, %31, %cst_22 {dimension_numbers = #tpu.dot_dimension_numbers<[1], [0], [0], [1], [0, 0, 1, 1], [], []>} : vector<16x64xbf16>, vector<64x256xbf16>, vector<16x256xf32> -> vector<16x256xf32>
    %c0_23 = arith.constant 0 : index
    %c0_24 = arith.constant 0 : index
    %33 = vector.load %arg10[%c0_23, %c0_24] : memref<1x256xf32, #tpu.memory_space<vmem>>, vector<1x256xf32>
    %34 = vector.broadcast %33 : vector<1x256xf32> to vector<16x256xf32>
    %35 = arith.addf %32, %34 : vector<16x256xf32>
    %cst_25 = arith.constant 0.000000e+00 : f32
    %36 = vector.broadcast %cst_25 : f32 to vector<16x256xf32>
    %37 = arith.maximumf %35, %36 : vector<16x256xf32>
    %38 = arith.truncf %37 : vector<16x256xf32> to vector<16x256xbf16>
    %c0_26 = arith.constant 0 : index
    %c0_27 = arith.constant 0 : index
    %39 = vector.load %arg11[%c0_26, %c0_27] : memref<256x512xbf16, #tpu.memory_space<vmem>>, vector<256x512xbf16>
    %cst_28 = arith.constant dense<0.000000e+00> : vector<16x512xf32>
    %40 = tpu.matmul %38, %39, %cst_28 {dimension_numbers = #tpu.dot_dimension_numbers<[1], [0], [0], [1], [0, 0, 1, 1], [], []>} : vector<16x256xbf16>, vector<256x512xbf16>, vector<16x512xf32> -> vector<16x512xf32>
    %c0_29 = arith.constant 0 : index
    %c0_30 = arith.constant 0 : index
    %41 = vector.load %arg12[%c0_29, %c0_30] : memref<1x512xf32, #tpu.memory_space<vmem>>, vector<1x512xf32>
    %42 = vector.broadcast %41 : vector<1x512xf32> to vector<16x512xf32>
    %43 = arith.addf %40, %42 : vector<16x512xf32>
    %cst_31 = arith.constant 0.000000e+00 : f32
    %44 = vector.broadcast %cst_31 : f32 to vector<16x512xf32>
    %45 = arith.maximumf %43, %44 : vector<16x512xf32>
    %46 = arith.truncf %45 : vector<16x512xf32> to vector<16x512xbf16>
    %c0_32 = arith.constant 0 : index
    %c0_33 = arith.constant 0 : index
    %47 = vector.load %arg13[%c0_32, %c0_33] : memref<512x256xbf16, #tpu.memory_space<vmem>>, vector<512x256xbf16>
    %cst_34 = arith.constant dense<0.000000e+00> : vector<16x256xf32>
    %48 = tpu.matmul %46, %47, %cst_34 {dimension_numbers = #tpu.dot_dimension_numbers<[1], [0], [0], [1], [0, 0, 1, 1], [], []>} : vector<16x512xbf16>, vector<512x256xbf16>, vector<16x256xf32> -> vector<16x256xf32>
    %c0_35 = arith.constant 0 : index
    %c0_36 = arith.constant 0 : index
    %49 = vector.load %arg14[%c0_35, %c0_36] : memref<1x256xf32, #tpu.memory_space<vmem>>, vector<1x256xf32>
    %50 = vector.broadcast %49 : vector<1x256xf32> to vector<16x256xf32>
    %51 = arith.addf %48, %50 : vector<16x256xf32>
    %52 = math.tanh %51 : vector<16x256xf32>
    %53 = arith.truncf %52 : vector<16x256xf32> to vector<16x256xbf16>
    %c0_37 = arith.constant 0 : index
    %c0_38 = arith.constant 0 : index
    %54 = vector.load %arg15[%c0_37, %c0_38] : memref<16x256xbf16, #tpu.memory_space<vmem>>, vector<16x256xbf16>
    tpu.vector_store %arg15[%c0_37, %c0_38], %53 {strides = array<i32>} : memref<16x256xbf16, #tpu.memory_space<vmem>>, vector<16x256xbf16>,
    %c0_39 = arith.constant 0 : index
    %c0_40 = arith.constant 0 : index
    %55 = vector.load %arg16[%c0_39, %c0_40] : memref<16x128xf32, #tpu.memory_space<vmem>>, vector<16x128xf32>
    tpu.vector_store %arg16[%c0_39, %c0_40], %21 {strides = array<i32>} : memref<16x128xf32, #tpu.memory_space<vmem>>, vector<16x128xf32>,
    return
  }
  func.func @transform_0(%arg0: i32) -> (i32, i32) {
    %c0_i32 = arith.constant 0 : i32
    %c0_i32_0 = arith.constant 0 : i32
    return %arg0, %c0_i32 : i32, i32
  }
  func.func @transform_1(%arg0: i32) -> (i32, i32) {
    %c0_i32 = arith.constant 0 : i32
    %c0_i32_0 = arith.constant 0 : i32
    return %arg0, %c0_i32 : i32, i32
  }
  func.func @transform_2(%arg0: i32) -> (i32, i32) {
    %c0_i32 = arith.constant 0 : i32
    %c0_i32_0 = arith.constant 0 : i32
    %c0_i32_1 = arith.constant 0 : i32
    return %c0_i32, %c0_i32_0 : i32, i32
  }
  func.func @transform_3(%arg0: i32) -> (i32, i32) {
    %c0_i32 = arith.constant 0 : i32
    %c0_i32_0 = arith.constant 0 : i32
    %c0_i32_1 = arith.constant 0 : i32
    return %c0_i32, %c0_i32_0 : i32, i32
  }
  func.func @transform_4(%arg0: i32) -> (i32, i32) {
    %c0_i32 = arith.constant 0 : i32
    %c0_i32_0 = arith.constant 0 : i32
    %c0_i32_1 = arith.constant 0 : i32
    return %c0_i32, %c0_i32_0 : i32, i32
  }
  func.func @transform_5(%arg0: i32) -> (i32, i32) {
    %c0_i32 = arith.constant 0 : i32
    %c0_i32_0 = arith.constant 0 : i32
    %c0_i32_1 = arith.constant 0 : i32
    return %c0_i32, %c0_i32_0 : i32, i32
  }
  func.func @transform_6(%arg0: i32) -> (i32, i32) {
    %c0_i32 = arith.constant 0 : i32
    %c0_i32_0 = arith.constant 0 : i32
    %c0_i32_1 = arith.constant 0 : i32
    return %c0_i32, %c0_i32_0 : i32, i32
  }
  func.func @transform_7(%arg0: i32) -> (i32, i32) {
    %c0_i32 = arith.constant 0 : i32
    %c0_i32_0 = arith.constant 0 : i32
    %c0_i32_1 = arith.constant 0 : i32
    return %c0_i32, %c0_i32_0 : i32, i32
  }
  func.func @transform_8(%arg0: i32) -> (i32, i32) {
    %c0_i32 = arith.constant 0 : i32
    %c0_i32_0 = arith.constant 0 : i32
    %c0_i32_1 = arith.constant 0 : i32
    return %c0_i32, %c0_i32_0 : i32, i32
  }
  func.func @transform_9(%arg0: i32) -> (i32, i32) {
    %c0_i32 = arith.constant 0 : i32
    %c0_i32_0 = arith.constant 0 : i32
    %c0_i32_1 = arith.constant 0 : i32
    return %c0_i32, %c0_i32_0 : i32, i32
  }
  func.func @transform_10(%arg0: i32) -> (i32, i32) {
    %c0_i32 = arith.constant 0 : i32
    %c0_i32_0 = arith.constant 0 : i32
    %c0_i32_1 = arith.constant 0 : i32
    return %c0_i32, %c0_i32_0 : i32, i32
  }
  func.func @transform_11(%arg0: i32) -> (i32, i32) {
    %c0_i32 = arith.constant 0 : i32
    %c0_i32_0 = arith.constant 0 : i32
    %c0_i32_1 = arith.constant 0 : i32
    return %c0_i32, %c0_i32_0 : i32, i32
  }
  func.func @transform_12(%arg0: i32) -> (i32, i32) {
    %c0_i32 = arith.constant 0 : i32
    %c0_i32_0 = arith.constant 0 : i32
    %c0_i32_1 = arith.constant 0 : i32
    return %c0_i32, %c0_i32_0 : i32, i32
  }
  func.func @transform_13(%arg0: i32) -> (i32, i32) {
    %c0_i32 = arith.constant 0 : i32
    %c0_i32_0 = arith.constant 0 : i32
    %c0_i32_1 = arith.constant 0 : i32
    return %c0_i32, %c0_i32_0 : i32, i32
  }
  func.func @transform_14(%arg0: i32) -> (i32, i32) {
    %c0_i32 = arith.constant 0 : i32
    %c0_i32_0 = arith.constant 0 : i32
    return %arg0, %c0_i32 : i32, i32
  }
  func.func @transform_15(%arg0: i32) -> (i32, i32) {
    %c0_i32 = arith.constant 0 : i32
    %c0_i32_0 = arith.constant 0 : i32
    return %arg0, %c0_i32 : i32, i32
  }
}

</mosaic_0001>

<llo_original>
// kernel: vae_forward.1
$region0: #{vae_forward.1}
  #allocation0 [shape = 'u32[]', space=smem, size = 0x4, offset = 0x4, fixed_abs, tag = 'smem constant byte address 0x4 - core index']
  #allocation1 [shape = 'u32[72,128]{1,0:T(1,128)}', space=vmem, size = 0x9000, scoped, tag = 'internal scratch']
  %s0 = inlined_call_operand.vmem [shape: bf16[16,256], index: 0, kind: input, shape index: {}]
  %s1 = inlined_call_operand.vmem [shape: f32[16,64], index: 1, kind: input, shape index: {}]
  %s2 = inlined_call_operand.hbm [shape: bf16[256,512], index: 2, kind: input, shape index: {}]
  %s3 = inlined_call_operand.vmem [shape: f32[1,512], index: 3, kind: input, shape index: {}]
  %s4 = inlined_call_operand.hbm [shape: bf16[512,256], index: 4, kind: input, shape index: {}]
  %s5 = inlined_call_operand.vmem [shape: f32[1,256], index: 5, kind: input, shape index: {}]
  %s6 = inlined_call_operand.vmem [shape: bf16[256,128], index: 6, kind: input, shape index: {}]
  %s7 = inlined_call_operand.vmem [shape: f32[1,128], index: 7, kind: input, shape index: {}]
  %s8 = inlined_call_operand.vmem [shape: bf16[64,256], index: 8, kind: input, shape index: {}]
  %s9 = inlined_call_operand.vmem [shape: f32[1,256], index: 9, kind: input, shape index: {}]
  %s10 = inlined_call_operand.hbm [shape: bf16[256,512], index: 10, kind: input, shape index: {}]
  %s11 = inlined_call_operand.vmem [shape: f32[1,512], index: 11, kind: input, shape index: {}]
  %s12 = inlined_call_operand.hbm [shape: bf16[512,256], index: 12, kind: input, shape index: {}]
  %s13 = inlined_call_operand.vmem [shape: f32[1,256], index: 13, kind: input, shape index: {}]
  %s14 = inlined_call_operand.vmem [shape: bf16[16,256], index: 14, kind: output, shape index: {0}]
  %s15 = inlined_call_operand.vmem [shape: f32[16,128], index: 15, kind: output, shape index: {1}]
  %16 = xla_tuple %s14, %s15
  %s17 = sld [smem:[#allocation0]]
  $region90: #{vae_forward.1} parent=0
    _
  %s19 = ssub.s32 1, %s17
  %s20 = scalar_select 0, %s19, %s17
  $region1: #{vae_forward.1} parent=0
    #allocation2 [shape = 'u8[262144]{0}', space=vmem, size = 0x40000, scoped, tag = 'input window, operand 2, single buffered']
    #allocation3 [shape = 's32[1]{0}', space=sflag, size = 0x4, scoped, tag = 'scoped memory for vae_forward.1']
    #allocation4 [shape = 'u8[262144]{0}', space=vmem, size = 0x40000, scoped, tag = 'input window, operand 4, single buffered']
    #allocation5 [shape = 's32[1]{0}', space=sflag, size = 0x4, scoped, tag = 'scoped memory for vae_forward.1']
    #allocation6 [shape = 'u8[262144]{0}', space=vmem, size = 0x40000, scoped, tag = 'input window, operand 10, single buffered']
    #allocation7 [shape = 'u8[262144]{0}', space=vmem, size = 0x40000, scoped, tag = 'input window, operand 12, single buffered']
    #allocation8 [shape = 's32[1]{0}', space=sflag, size = 0x4, scoped, tag = 'scoped memory for vae_forward.1']
    %21 = vsyncpa [#allocation3], 0
    %22 = vsyncpa [#allocation5], 0
    %23 = vsyncpa [#allocation8], 0
    // Predicated region
    $region2: #{vae_forward.1} parent=1 // pred_check
      _
    $region3: #{vae_forward.1} parent=1 // pred_check_branch
      %25 = sbr.rel (0) target = $region5
    $region4: #{vae_forward.1} parent=1 // pred_region
      _
    $region5: #{vae_forward.1} parent=1 // pred_fallthru
      _
    // Predicated region
    $region6: #{vae_forward.1} parent=1 // pred_check
      _
    $region7: #{vae_forward.1} parent=1 // pred_check_branch
      %27 = sbr.rel (0) target = $region9
    $region8: #{vae_forward.1} parent=1 // pred_region
      _
    $region9: #{vae_forward.1} parent=1 // pred_fallthru
      _
    // Predicated region
    $region10: #{vae_forward.1} parent=1 // pred_check
      _
    $region11: #{vae_forward.1} parent=1 // pred_check_branch
      %29 = sbr.rel (0) target = $region13
    $region12: #{vae_forward.1} parent=1 // pred_region
      %31 = vsyncadd [#allocation3], 0
      %s32 = sshll.u32 %s2, 4
      %s33 = int_to_ptr.hbm [resolvable:$true] %s32
      %s34 = sshll.u32 [#allocation2], 4
      %s35 = int_to_ptr.vmem [resolvable:$true] %s34
      %40 = dma.hbm_to_vmem [thread:$0]  %s33, 8192, %s35, [#allocation3], 256, 256, 16
    $region13: #{vae_forward.1} parent=1 // pred_fallthru
      _
    // Predicated region
    $region14: #{vae_forward.1} parent=1 // pred_check
      _
    $region15: #{vae_forward.1} parent=1 // pred_check_branch
      %42 = sbr.rel (0) target = $region17
    $region16: #{vae_forward.1} parent=1 // pred_region
      _
    $region17: #{vae_forward.1} parent=1 // pred_fallthru
      _
    // Predicated region
    $region18: #{vae_forward.1} parent=1 // pred_check
      _
    $region19: #{vae_forward.1} parent=1 // pred_check_branch
      %44 = sbr.rel (0) target = $region21
    $region20: #{vae_forward.1} parent=1 // pred_region
      %46 = vsyncadd [#allocation5], 0
      %s47 = sshll.u32 %s4, 4
      %s48 = int_to_ptr.hbm [resolvable:$true] %s47
      %s49 = sshll.u32 [#allocation4], 4
      %s50 = int_to_ptr.vmem [resolvable:$true] %s49
      %55 = dma.hbm_to_vmem [thread:$0]  %s48, 8192, %s50, [#allocation5], 128, 128, 8
    $region21: #{vae_forward.1} parent=1 // pred_fallthru
      _
    // Predicated region
    $region22: #{vae_forward.1} parent=1 // pred_check
      _
    $region23: #{vae_forward.1} parent=1 // pred_check_branch
      %57 = sbr.rel (0) target = $region25
    $region24: #{vae_forward.1} parent=1 // pred_region
      _
    $region25: #{vae_forward.1} parent=1 // pred_fallthru
      _
    // Predicated region
    $region26: #{vae_forward.1} parent=1 // pred_check
      _
    $region27: #{vae_forward.1} parent=1 // pred_check_branch
      %59 = sbr.rel (0) target = $region29
    $region28: #{vae_forward.1} parent=1 // pred_region
      _
    $region29: #{vae_forward.1} parent=1 // pred_fallthru
      _
    // Predicated region
    $region30: #{vae_forward.1} parent=1 // pred_check
      _
    $region31: #{vae_forward.1} parent=1 // pred_check_branch
      %61 = sbr.rel (0) target = $region33
    $region32: #{vae_forward.1} parent=1 // pred_region
      _
    $region33: #{vae_forward.1} parent=1 // pred_fallthru
      _
    // Predicated region
    $region34: #{vae_forward.1} parent=1 // pred_check
      _
    $region35: #{vae_forward.1} parent=1 // pred_check_branch
      %63 = sbr.rel (0) target = $region37
    $region36: #{vae_forward.1} parent=1 // pred_region
      _
    $region37: #{vae_forward.1} parent=1 // pred_fallthru
      _
    // Predicated region
    $region38: #{vae_forward.1} parent=1 // pred_check
      _
    $region39: #{vae_forward.1} parent=1 // pred_check_branch
      %65 = sbr.rel (0) target = $region41
    $region40: #{vae_forward.1} parent=1 // pred_region
      _
    $region41: #{vae_forward.1} parent=1 // pred_fallthru
      _
    // Predicated region
    $region42: #{vae_forward.1} parent=1 // pred_check
      _
    $region43: #{vae_forward.1} parent=1 // pred_check_branch
      %67 = sbr.rel (0) target = $region45
    $region44: #{vae_forward.1} parent=1 // pred_region
      %69 = vsyncadd [#allocation5], 0
      %s70 = sshll.u32 %s10, 4
      %s71 = int_to_ptr.hbm [resolvable:$true] %s70
      %s72 = sshll.u32 [#allocation6], 4
      %s73 = int_to_ptr.vmem [resolvable:$true] %s72
      %78 = dma.hbm_to_vmem [thread:$0]  %s71, 8192, %s73, [#allocation5], 256, 256, 16
    $region45: #{vae_forward.1} parent=1 // pred_fallthru
      _
    // Predicated region
    $region46: #{vae_forward.1} parent=1 // pred_check
      _
    $region47: #{vae_forward.1} parent=1 // pred_check_branch
      %80 = sbr.rel (0) target = $region49
    $region48: #{vae_forward.1} parent=1 // pred_region
      _
    $region49: #{vae_forward.1} parent=1 // pred_fallthru
      _
    // Predicated region
    $region50: #{vae_forward.1} parent=1 // pred_check
      _
    $region51: #{vae_forward.1} parent=1 // pred_check_branch
      %82 = sbr.rel (0) target = $region53
    $region52: #{vae_forward.1} parent=1 // pred_region
      %84 = vsyncadd [#allocation8], 0
      %s85 = sshll.u32 %s12, 4
      %s86 = int_to_ptr.hbm [resolvable:$true] %s85
      %s87 = sshll.u32 [#allocation7], 4
      %s88 = int_to_ptr.vmem [resolvable:$true] %s87
      %93 = dma.hbm_to_vmem [thread:$0]  %s86, 8192, %s88, [#allocation8], 128, 128, 8
    $region53: #{vae_forward.1} parent=1 // pred_fallthru
      _
    // Predicated region
    $region54: #{vae_forward.1} parent=1 // pred_check
      _
    $region55: #{vae_forward.1} parent=1 // pred_check_branch
      %95 = sbr.rel (0) target = $region57
    $region56: #{vae_forward.1} parent=1 // pred_region
      _
    $region57: #{vae_forward.1} parent=1 // pred_fallthru
      _
    // Predicated region
    $region58: #{vae_forward.1} parent=1 // pred_check
      _
    $region59: #{vae_forward.1} parent=1 // pred_check_branch
      %97 = sbr.rel (0) target = $region61
    $region60: #{vae_forward.1} parent=1 // pred_region
      %99 = dma.done [#allocation3], 8192
    $region61: #{vae_forward.1} parent=1 // pred_fallthru
      _
    // Predicated region
    $region62: #{vae_forward.1} parent=1 // pred_check
      _
    $region63: #{vae_forward.1} parent=1 // pred_check_branch
      %101 = sbr.rel (0) target = $region65
    $region64: #{vae_forward.1} parent=1 // pred_region
      %103 = dma.done [#allocation5], 8192
    $region65: #{vae_forward.1} parent=1 // pred_fallthru
      _
    // Predicated region
    $region66: #{vae_forward.1} parent=1 // pred_check
      _
    $region67: #{vae_forward.1} parent=1 // pred_check_branch
      %105 = sbr.rel (0) target = $region69
    $region68: #{vae_forward.1} parent=1 // pred_region
      %107 = dma.done [#allocation5], 8192
    $region69: #{vae_forward.1} parent=1 // pred_fallthru
      _
    // Predicated region
    $region70: #{vae_forward.1} parent=1 // pred_check
      _
    $region71: #{vae_forward.1} parent=1 // pred_check_branch
      %109 = sbr.rel (0) target = $region73
    $region72: #{vae_forward.1} parent=1 // pred_region
      %111 = dma.done [#allocation8], 8192
    $region73: #{vae_forward.1} parent=1 // pred_fallthru
      _
    %v113 = vld [vmem:[%s0] sm:$0xff]
    %v114 = vld [vmem:[%s0 + $0x8] sm:$0xff]
    %v115 = vld [vmem:[#allocation2] sm:$0xff]
    %v116 = vld [vmem:[#allocation2 + $0x8] sm:$0xff]
    %v117 = vld [vmem:[#allocation2 + $0x10] sm:$0xff]
    %v118 = vld [vmem:[#allocation2 + $0x18] sm:$0xff]
    %v119 = vld [vmem:[#allocation2 + $0x20] sm:$0xff]
    %v120 = vld [vmem:[#allocation2 + $0x28] sm:$0xff]
    %v121 = vld [vmem:[#allocation2 + $0x30] sm:$0xff]
    %v122 = vld [vmem:[#allocation2 + $0x38] sm:$0xff]
    %v123 = vld [vmem:[#allocation2 + $0x40] sm:$0xff]
    %v124 = vld [vmem:[#allocation2 + $0x48] sm:$0xff]
    %v125 = vld [vmem:[#allocation2 + $0x50] sm:$0xff]
    %v126 = vld [vmem:[#allocation2 + $0x58] sm:$0xff]
    %v127 = vld [vmem:[#allocation2 + $0x60] sm:$0xff]
    %v128 = vld [vmem:[#allocation2 + $0x68] sm:$0xff]
    %v129 = vld [vmem:[#allocation2 + $0x70] sm:$0xff]
    %v130 = vld [vmem:[#allocation2 + $0x78] sm:$0xff]
    %v131 = vld [vmem:[#allocation2 + $0x80] sm:$0xff]
    %v132 = vld [vmem:[#allocation2 + $0x88] sm:$0xff]
    %v133 = vld [vmem:[#allocation2 + $0x90] sm:$0xff]
    %v134 = vld [vmem:[#allocation2 + $0x98] sm:$0xff]
    %v135 = vld [vmem:[#allocation2 + $0xa0] sm:$0xff]
    %v136 = vld [vmem:[#allocation2 + $0xa8] sm:$0xff]
    %v137 = vld [vmem:[#allocation2 + $0xb0] sm:$0xff]
    %v138 = vld [vmem:[#allocation2 + $0xb8] sm:$0xff]
    %v139 = vld [vmem:[#allocation2 + $0xc0] sm:$0xff]
    %v140 = vld [vmem:[#allocation2 + $0xc8] sm:$0xff]
    %v141 = vld [vmem:[#allocation2 + $0xd0] sm:$0xff]
    %v142 = vld [vmem:[#allocation2 + $0xd8] sm:$0xff]
    %v143 = vld [vmem:[#allocation2 + $0xe0] sm:$0xff]
    %v144 = vld [vmem:[#allocation2 + $0xe8] sm:$0xff]
    %v145 = vld [vmem:[#allocation2 + $0xf0] sm:$0xff]
    %v146 = vld [vmem:[#allocation2 + $0xf8] sm:$0xff]
    %v147 = vld [vmem:[#allocation2 + $0x100] sm:$0xff]
    %v148 = vld [vmem:[#allocation2 + $0x108] sm:$0xff]
    %v149 = vld [vmem:[#allocation2 + $0x110] sm:$0xff]
    %v150 = vld [vmem:[#allocation2 + $0x118] sm:$0xff]
    %v151 = vld [vmem:[#allocation2 + $0x120] sm:$0xff]
    %v152 = vld [vmem:[#allocation2 + $0x128] sm:$0xff]
    %v153 = vld [vmem:[#allocation2 + $0x130] sm:$0xff]
    %v154 = vld [vmem:[#allocation2 + $0x138] sm:$0xff]
    %v155 = vld [vmem:[#allocation2 + $0x140] sm:$0xff]
    %v156 = vld [vmem:[#allocation2 + $0x148] sm:$0xff]
    %v157 = vld [vmem:[#allocation2 + $0x150] sm:$0xff]
    %v158 = vld [vmem:[#allocation2 + $0x158] sm:$0xff]
    %v159 = vld [vmem:[#allocation2 + $0x160] sm:$0xff]
    %v160 = vld [vmem:[#allocation2 + $0x168] sm:$0xff]
    %v161 = vld [vmem:[#allocation2 + $0x170] sm:$0xff]
    %v162 = vld [vmem:[#allocation2 + $0x178] sm:$0xff]
    %v163 = vld [vmem:[#allocation2 + $0x180] sm:$0xff]
    %v164 = vld [vmem:[#allocation2 + $0x188] sm:$0xff]
    %v165 = vld [vmem:[#allocation2 + $0x190] sm:$0xff]
    %v166 = vld [vmem:[#allocation2 + $0x198] sm:$0xff]
    %v167 = vld [vmem:[#allocation2 + $0x1a0] sm:$0xff]
    %v168 = vld [vmem:[#allocation2 + $0x1a8] sm:$0xff]
    %v169 = vld [vmem:[#allocation2 + $0x1b0] sm:$0xff]
    %v170 = vld [vmem:[#allocation2 + $0x1b8] sm:$0xff]
    %v171 = vld [vmem:[#allocation2 + $0x1c0] sm:$0xff]
    %v172 = vld [vmem:[#allocation2 + $0x1c8] sm:$0xff]
    %v173 = vld [vmem:[#allocation2 + $0x1d0] sm:$0xff]
    %v174 = vld [vmem:[#allocation2 + $0x1d8] sm:$0xff]
    %v175 = vld [vmem:[#allocation2 + $0x1e0] sm:$0xff]
    %v176 = vld [vmem:[#allocation2 + $0x1e8] sm:$0xff]
    %v177 = vld [vmem:[#allocation2 + $0x1f0] sm:$0xff]
    %v178 = vld [vmem:[#allocation2 + $0x1f8] sm:$0xff]
    %v179 = vld [vmem:[%s3] sm:$0xf]
    %v181 = vperm.slane %v179, 0
    %v182 = vperm.slane %v179, 1
    %v183 = vperm.slane %v179, 2
    %v184 = vperm.slane %v179, 3
    %v191 = vunpack.c.l.b16 %v113
    %v192 = vunpack.c.h.b16 %v113
    %v193 = vunpack.c.l.b16 %v114
    %v194 = vunpack.c.h.b16 %v114
    %v195 = vpack.c.b16 %v193, %v191
    %v196 = vpack.c.b16 %v194, %v192
    %v263 = vunpack.c.l.b16 %v115
    %v264 = vunpack.c.h.b16 %v115
    %v265 = vunpack.c.l.b16 %v116
    %v266 = vunpack.c.h.b16 %v116
    %v267 = vunpack.c.l.b16 %v117
    %v268 = vunpack.c.h.b16 %v117
    %v269 = vunpack.c.l.b16 %v118
    %v270 = vunpack.c.h.b16 %v118
    %v271 = vunpack.c.l.b16 %v119
    %v272 = vunpack.c.h.b16 %v119
    %v273 = vunpack.c.l.b16 %v120
    %v274 = vunpack.c.h.b16 %v120
    %v275 = vunpack.c.l.b16 %v121
    %v276 = vunpack.c.h.b16 %v121
    %v277 = vunpack.c.l.b16 %v122
    %v278 = vunpack.c.h.b16 %v122
    %v279 = vunpack.c.l.b16 %v123
    %v280 = vunpack.c.h.b16 %v123
    %v281 = vunpack.c.l.b16 %v124
    %v282 = vunpack.c.h.b16 %v124
    %v283 = vunpack.c.l.b16 %v125
    %v284 = vunpack.c.h.b16 %v125
    %v285 = vunpack.c.l.b16 %v126
    %v286 = vunpack.c.h.b16 %v126
    %v287 = vunpack.c.l.b16 %v127
    %v288 = vunpack.c.h.b16 %v127
    %v289 = vunpack.c.l.b16 %v128
    %v290 = vunpack.c.h.b16 %v128
    %v291 = vunpack.c.l.b16 %v129
    %v292 = vunpack.c.h.b16 %v129
    %v293 = vunpack.c.l.b16 %v130
    %v294 = vunpack.c.h.b16 %v130
    %v295 = vunpack.c.l.b16 %v131
    %v296 = vunpack.c.h.b16 %v131
    %v297 = vunpack.c.l.b16 %v132
    %v298 = vunpack.c.h.b16 %v132
    %v299 = vunpack.c.l.b16 %v133
    %v300 = vunpack.c.h.b16 %v133
    %v301 = vunpack.c.l.b16 %v134
    %v302 = vunpack.c.h.b16 %v134
    %v303 = vunpack.c.l.b16 %v135
    %v304 = vunpack.c.h.b16 %v135
    %v305 = vunpack.c.l.b16 %v136
    %v306 = vunpack.c.h.b16 %v136
    %v307 = vunpack.c.l.b16 %v137
    %v308 = vunpack.c.h.b16 %v137
    %v309 = vunpack.c.l.b16 %v138
    %v310 = vunpack.c.h.b16 %v138
    %v311 = vunpack.c.l.b16 %v139
    %v312 = vunpack.c.h.b16 %v139
    %v313 = vunpack.c.l.b16 %v140
    %v314 = vunpack.c.h.b16 %v140
    %v315 = vunpack.c.l.b16 %v141
    %v316 = vunpack.c.h.b16 %v141
    %v317 = vunpack.c.l.b16 %v142
    %v318 = vunpack.c.h.b16 %v142
    %v319 = vunpack.c.l.b16 %v143
    %v320 = vunpack.c.h.b16 %v143
    %v321 = vunpack.c.l.b16 %v144
    %v322 = vunpack.c.h.b16 %v144
    %v323 = vunpack.c.l.b16 %v145
    %v324 = vunpack.c.h.b16 %v145
    %v325 = vunpack.c.l.b16 %v146
    %v326 = vunpack.c.h.b16 %v146
    %v327 = vunpack.c.l.b16 %v147
    %v328 = vunpack.c.h.b16 %v147
    %v329 = vunpack.c.l.b16 %v148
    %v330 = vunpack.c.h.b16 %v148
    %v331 = vunpack.c.l.b16 %v149
    %v332 = vunpack.c.h.b16 %v149
    %v333 = vunpack.c.l.b16 %v150
    %v334 = vunpack.c.h.b16 %v150
    %v335 = vunpack.c.l.b16 %v151
    %v336 = vunpack.c.h.b16 %v151
    %v337 = vunpack.c.l.b16 %v152
    %v338 = vunpack.c.h.b16 %v152
    %v339 = vunpack.c.l.b16 %v153
    %v340 = vunpack.c.h.b16 %v153
    %v341 = vunpack.c.l.b16 %v154
    %v342 = vunpack.c.h.b16 %v154
    %v343 = vunpack.c.l.b16 %v155
    %v344 = vunpack.c.h.b16 %v155
    %v345 = vunpack.c.l.b16 %v156
    %v346 = vunpack.c.h.b16 %v156
    %v347 = vunpack.c.l.b16 %v157
    %v348 = vunpack.c.h.b16 %v157
    %v349 = vunpack.c.l.b16 %v158
    %v350 = vunpack.c.h.b16 %v158
    %v351 = vunpack.c.l.b16 %v159
    %v352 = vunpack.c.h.b16 %v159
    %v353 = vunpack.c.l.b16 %v160
    %v354 = vunpack.c.h.b16 %v160
    %v355 = vunpack.c.l.b16 %v161
    %v356 = vunpack.c.h.b16 %v161
    %v357 = vunpack.c.l.b16 %v162
    %v358 = vunpack.c.h.b16 %v162
    %v359 = vunpack.c.l.b16 %v163
    %v360 = vunpack.c.h.b16 %v163
    %v361 = vunpack.c.l.b16 %v164
    %v362 = vunpack.c.h.b16 %v164
    %v363 = vunpack.c.l.b16 %v165
    %v364 = vunpack.c.h.b16 %v165
    %v365 = vunpack.c.l.b16 %v166
    %v366 = vunpack.c.h.b16 %v166
    %v367 = vunpack.c.l.b16 %v167
    %v368 = vunpack.c.h.b16 %v167
    %v369 = vunpack.c.l.b16 %v168
    %v370 = vunpack.c.h.b16 %v168
    %v371 = vunpack.c.l.b16 %v169
    %v372 = vunpack.c.h.b16 %v169
    %v373 = vunpack.c.l.b16 %v170
    %v374 = vunpack.c.h.b16 %v170
    %v375 = vunpack.c.l.b16 %v171
    %v376 = vunpack.c.h.b16 %v171
    %v377 = vunpack.c.l.b16 %v172
    %v378 = vunpack.c.h.b16 %v172
    %v379 = vunpack.c.l.b16 %v173
    %v380 = vunpack.c.h.b16 %v173
    %v381 = vunpack.c.l.b16 %v174
    %v382 = vunpack.c.h.b16 %v174
    %v383 = vunpack.c.l.b16 %v175
    %v384 = vunpack.c.h.b16 %v175
    %v385 = vunpack.c.l.b16 %v176
    %v386 = vunpack.c.h.b16 %v176
    %v387 = vunpack.c.l.b16 %v177
    %v388 = vunpack.c.h.b16 %v177
    %v389 = vunpack.c.l.b16 %v178
    %v390 = vunpack.c.h.b16 %v178
    %v391 = vpack.c.b16 %v267, %v263
    %v392 = vpack.c.b16 %v268, %v264
    %v393 = vpack.c.b16 %v269, %v265
    %v394 = vpack.c.b16 %v270, %v266
    %v395 = vpack.c.b16 %v275, %v271
    %v396 = vpack.c.b16 %v276, %v272
    %v397 = vpack.c.b16 %v277, %v273
    %v398 = vpack.c.b16 %v278, %v274
    %v399 = vpack.c.b16 %v283, %v279
    %v400 = vpack.c.b16 %v284, %v280
    %v401 = vpack.c.b16 %v285, %v281
    %v402 = vpack.c.b16 %v286, %v282
    %v403 = vpack.c.b16 %v291, %v287
    %v404 = vpack.c.b16 %v292, %v288
    %v405 = vpack.c.b16 %v293, %v289
    %v406 = vpack.c.b16 %v294, %v290
    %v407 = vpack.c.b16 %v299, %v295
    %v408 = vpack.c.b16 %v300, %v296
    %v409 = vpack.c.b16 %v301, %v297
    %v410 = vpack.c.b16 %v302, %v298
    %v411 = vpack.c.b16 %v307, %v303
    %v412 = vpack.c.b16 %v308, %v304
    %v413 = vpack.c.b16 %v309, %v305
    %v414 = vpack.c.b16 %v310, %v306
    %v415 = vpack.c.b16 %v315, %v311
    %v416 = vpack.c.b16 %v316, %v312
    %v417 = vpack.c.b16 %v317, %v313
    %v418 = vpack.c.b16 %v318, %v314
    %v419 = vpack.c.b16 %v323, %v319
    %v420 = vpack.c.b16 %v324, %v320
    %v421 = vpack.c.b16 %v325, %v321
    %v422 = vpack.c.b16 %v326, %v322
    %v423 = vpack.c.b16 %v331, %v327
    %v424 = vpack.c.b16 %v332, %v328
    %v425 = vpack.c.b16 %v333, %v329
    %v426 = vpack.c.b16 %v334, %v330
    %v427 = vpack.c.b16 %v339, %v335
    %v428 = vpack.c.b16 %v340, %v336
    %v429 = vpack.c.b16 %v341, %v337
    %v430 = vpack.c.b16 %v342, %v338
    %v431 = vpack.c.b16 %v347, %v343
    %v432 = vpack.c.b16 %v348, %v344
    %v433 = vpack.c.b16 %v349, %v345
    %v434 = vpack.c.b16 %v350, %v346
    %v435 = vpack.c.b16 %v355, %v351
    %v436 = vpack.c.b16 %v356, %v352
    %v437 = vpack.c.b16 %v357, %v353
    %v438 = vpack.c.b16 %v358, %v354
    %v439 = vpack.c.b16 %v363, %v359
    %v440 = vpack.c.b16 %v364, %v360
    %v441 = vpack.c.b16 %v365, %v361
    %v442 = vpack.c.b16 %v366, %v362
    %v443 = vpack.c.b16 %v371, %v367
    %v444 = vpack.c.b16 %v372, %v368
    %v445 = vpack.c.b16 %v373, %v369
    %v446 = vpack.c.b16 %v374, %v370
    %v447 = vpack.c.b16 %v379, %v375
    %v448 = vpack.c.b16 %v380, %v376
    %v449 = vpack.c.b16 %v381, %v377
    %v450 = vpack.c.b16 %v382, %v378
    %v451 = vpack.c.b16 %v387, %v383
    %v452 = vpack.c.b16 %v388, %v384
    %v453 = vpack.c.b16 %v389, %v385
    %v454 = vpack.c.b16 %v390, %v386
    %519 = vmatpush.bf16.msra.mxu0 %v419
    %520 = vmatpush.bf16.msra.mxu0 %v415
    %521 = vmatpush.bf16.msra.mxu0 %v411
    %522 = vmatpush.bf16.msra.mxu0 %v407
    %523 = vmatpush.bf16.msra.mxu0 %v403
    %524 = vmatpush.bf16.msra.mxu0 %v399
    %525 = vmatpush.bf16.msra.mxu0 %v395
    %526 = vmatpush.bf16.msra.mxu0 %v391
    %527 = vmatmul.bf16.gmra.mxu0 %v195
    %v528 = vpop.f32.mrf.mxu0
    %v529 = vadd.f32 %v181, %v528
    %v530 = vpop.f32.mrf.mxu0
    %v531 = vadd.f32 %v181, %v530
    %532 = vdwg.mxu0
    %533 = vmatpush.bf16.msra.mxu0 %v451
    %534 = vmatpush.bf16.msra.mxu0 %v447
    %535 = vmatpush.bf16.msra.mxu0 %v443
    %536 = vmatpush.bf16.msra.mxu0 %v439
    %537 = vmatpush.bf16.msra.mxu0 %v435
    %538 = vmatpush.bf16.msra.mxu0 %v431
    %539 = vmatpush.bf16.msra.mxu0 %v427
    %540 = vmatpush.bf16.msra.mxu0 %v423
    %541 = vmatmul.bf16.gmra.mxu0 %v196
    %v542 = vpop.f32.mrf.mxu0
    %v543 = vadd.f32 %v529, %v542
    %v544 = vpop.f32.mrf.mxu0
    %v545 = vadd.f32 %v531, %v544
    %546 = vdwg.mxu0
    %547 = vmatpush.bf16.msra.mxu0 %v420
    %548 = vmatpush.bf16.msra.mxu0 %v416
    %549 = vmatpush.bf16.msra.mxu0 %v412
    %550 = vmatpush.bf16.msra.mxu0 %v408
    %551 = vmatpush.bf16.msra.mxu0 %v404
    %552 = vmatpush.bf16.msra.mxu0 %v400
    %553 = vmatpush.bf16.msra.mxu0 %v396
    %554 = vmatpush.bf16.msra.mxu0 %v392
    %555 = vmatmul.bf16.gmra.mxu0 %v195
    %v556 = vpop.f32.mrf.mxu0
    %v557 = vadd.f32 %v182, %v556
    %v558 = vpop.f32.mrf.mxu0
    %v559 = vadd.f32 %v182, %v558
    %560 = vdwg.mxu0
    %561 = vmatpush.bf16.msra.mxu0 %v452
    %562 = vmatpush.bf16.msra.mxu0 %v448
    %563 = vmatpush.bf16.msra.mxu0 %v444
    %564 = vmatpush.bf16.msra.mxu0 %v440
    %565 = vmatpush.bf16.msra.mxu0 %v436
    %566 = vmatpush.bf16.msra.mxu0 %v432
    %567 = vmatpush.bf16.msra.mxu0 %v428
    %568 = vmatpush.bf16.msra.mxu0 %v424
    %569 = vmatmul.bf16.gmra.mxu0 %v196
    %v570 = vpop.f32.mrf.mxu0
    %v571 = vadd.f32 %v557, %v570
    %v572 = vpop.f32.mrf.mxu0
    %v573 = vadd.f32 %v559, %v572
    %574 = vdwg.mxu0
    %575 = vmatpush.bf16.msra.mxu0 %v421
    %576 = vmatpush.bf16.msra.mxu0 %v417
    %577 = vmatpush.bf16.msra.mxu0 %v413
    %578 = vmatpush.bf16.msra.mxu0 %v409
    %579 = vmatpush.bf16.msra.mxu0 %v405
    %580 = vmatpush.bf16.msra.mxu0 %v401
    %581 = vmatpush.bf16.msra.mxu0 %v397
    %582 = vmatpush.bf16.msra.mxu0 %v393
    %583 = vmatmul.bf16.gmra.mxu0 %v195
    %v584 = vpop.f32.mrf.mxu0
    %v585 = vadd.f32 %v183, %v584
    %v586 = vpop.f32.mrf.mxu0
    %v587 = vadd.f32 %v183, %v586
    %588 = vdwg.mxu0
    %589 = vmatpush.bf16.msra.mxu0 %v453
    %590 = vmatpush.bf16.msra.mxu0 %v449
    %591 = vmatpush.bf16.msra.mxu0 %v445
    %592 = vmatpush.bf16.msra.mxu0 %v441
    %593 = vmatpush.bf16.msra.mxu0 %v437
    %594 = vmatpush.bf16.msra.mxu0 %v433
    %595 = vmatpush.bf16.msra.mxu0 %v429
    %596 = vmatpush.bf16.msra.mxu0 %v425
    %597 = vmatmul.bf16.gmra.mxu0 %v196
    %v598 = vpop.f32.mrf.mxu0
    %v599 = vadd.f32 %v585, %v598
    %v600 = vpop.f32.mrf.mxu0
    %v601 = vadd.f32 %v587, %v600
    %602 = vdwg.mxu0
    %603 = vmatpush.bf16.msra.mxu0 %v422
    %604 = vmatpush.bf16.msra.mxu0 %v418
    %605 = vmatpush.bf16.msra.mxu0 %v414
    %606 = vmatpush.bf16.msra.mxu0 %v410
    %607 = vmatpush.bf16.msra.mxu0 %v406
    %608 = vmatpush.bf16.msra.mxu0 %v402
    %609 = vmatpush.bf16.msra.mxu0 %v398
    %610 = vmatpush.bf16.msra.mxu0 %v394
    %611 = vmatmul.bf16.gmra.mxu0 %v195
    %v612 = vpop.f32.mrf.mxu0
    %v613 = vadd.f32 %v184, %v612
    %v614 = vpop.f32.mrf.mxu0
    %v615 = vadd.f32 %v184, %v614
    %616 = vdwg.mxu0
    %617 = vmatpush.bf16.msra.mxu0 %v454
    %618 = vmatpush.bf16.msra.mxu0 %v450
    %619 = vmatpush.bf16.msra.mxu0 %v446
    %620 = vmatpush.bf16.msra.mxu0 %v442
    %621 = vmatpush.bf16.msra.mxu0 %v438
    %622 = vmatpush.bf16.msra.mxu0 %v434
    %623 = vmatpush.bf16.msra.mxu0 %v430
    %624 = vmatpush.bf16.msra.mxu0 %v426
    %625 = vmatmul.bf16.gmra.mxu0 %v196
    %v626 = vpop.f32.mrf.mxu0
    %v627 = vadd.f32 %v613, %v626
    %v628 = vpop.f32.mrf.mxu0
    %v629 = vadd.f32 %v615, %v628
    %630 = vdwg.mxu0
    %v631 = vmax.f32 %v543, 0.0
    %v632 = vmax.f32 %v571, 0.0
    %v633 = vmax.f32 %v599, 0.0
    %v634 = vmax.f32 %v627, 0.0
    %v635 = vmax.f32 %v545, 0.0
    %v636 = vmax.f32 %v573, 0.0
    %v637 = vmax.f32 %v601, 0.0
    %v638 = vmax.f32 %v629, 0.0
    %v639 = vpack.c.bf16 %v635, %v631
    %v640 = vpack.c.bf16 %v636, %v632
    %v641 = vpack.c.bf16 %v637, %v633
    %v642 = vpack.c.bf16 %v638, %v634
    %v643 = vld [vmem:[#allocation4] sm:$0xff]
    %v644 = vld [vmem:[#allocation4 + $0x8] sm:$0xff]
    %v645 = vld [vmem:[#allocation4 + $0x10] sm:$0xff]
    %v646 = vld [vmem:[#allocation4 + $0x18] sm:$0xff]
    %v647 = vld [vmem:[#allocation4 + $0x20] sm:$0xff]
    %v648 = vld [vmem:[#allocation4 + $0x28] sm:$0xff]
    %v649 = vld [vmem:[#allocation4 + $0x30] sm:$0xff]
    %v650 = vld [vmem:[#allocation4 + $0x38] sm:$0xff]
    %v651 = vld [vmem:[#allocation4 + $0x40] sm:$0xff]
    %v652 = vld [vmem:[#allocation4 + $0x48] sm:$0xff]
    %v653 = vld [vmem:[#allocation4 + $0x50] sm:$0xff]
    %v654 = vld [vmem:[#allocation4 + $0x58] sm:$0xff]
    %v655 = vld [vmem:[#allocation4 + $0x60] sm:$0xff]
    %v656 = vld [vmem:[#allocation4 + $0x68] sm:$0xff]
    %v657 = vld [vmem:[#allocation4 + $0x70] sm:$0xff]
    %v658 = vld [vmem:[#allocation4 + $0x78] sm:$0xff]
    %v659 = vld [vmem:[#allocation4 + $0x80] sm:$0xff]
    %v660 = vld [vmem:[#allocation4 + $0x88] sm:$0xff]
    %v661 = vld [vmem:[#allocation4 + $0x90] sm:$0xff]
    %v662 = vld [vmem:[#allocation4 + $0x98] sm:$0xff]
    %v663 = vld [vmem:[#allocation4 + $0xa0] sm:$0xff]
    %v664 = vld [vmem:[#allocation4 + $0xa8] sm:$0xff]
    %v665 = vld [vmem:[#allocation4 + $0xb0] sm:$0xff]
    %v666 = vld [vmem:[#allocation4 + $0xb8] sm:$0xff]
    %v667 = vld [vmem:[#allocation4 + $0xc0] sm:$0xff]
    %v668 = vld [vmem:[#allocation4 + $0xc8] sm:$0xff]
    %v669 = vld [vmem:[#allocation4 + $0xd0] sm:$0xff]
    %v670 = vld [vmem:[#allocation4 + $0xd8] sm:$0xff]
    %v671 = vld [vmem:[#allocation4 + $0xe0] sm:$0xff]
    %v672 = vld [vmem:[#allocation4 + $0xe8] sm:$0xff]
    %v673 = vld [vmem:[#allocation4 + $0xf0] sm:$0xff]
    %v674 = vld [vmem:[#allocation4 + $0xf8] sm:$0xff]
    %v675 = vld [vmem:[#allocation4 + $0x100] sm:$0xff]
    %v676 = vld [vmem:[#allocation4 + $0x108] sm:$0xff]
    %v677 = vld [vmem:[#allocation4 + $0x110] sm:$0xff]
    %v678 = vld [vmem:[#allocation4 + $0x118] sm:$0xff]
    %v679 = vld [vmem:[#allocation4 + $0x120] sm:$0xff]
    %v680 = vld [vmem:[#allocation4 + $0x128] sm:$0xff]
    %v681 = vld [vmem:[#allocation4 + $0x130] sm:$0xff]
    %v682 = vld [vmem:[#allocation4 + $0x138] sm:$0xff]
    %v683 = vld [vmem:[#allocation4 + $0x140] sm:$0xff]
    %v684 = vld [vmem:[#allocation4 + $0x148] sm:$0xff]
    %v685 = vld [vmem:[#allocation4 + $0x150] sm:$0xff]
    %v686 = vld [vmem:[#allocation4 + $0x158] sm:$0xff]
    %v687 = vld [vmem:[#allocation4 + $0x160] sm:$0xff]
    %v688 = vld [vmem:[#allocation4 + $0x168] sm:$0xff]
    %v689 = vld [vmem:[#allocation4 + $0x170] sm:$0xff]
    %v690 = vld [vmem:[#allocation4 + $0x178] sm:$0xff]
    %v691 = vld [vmem:[#allocation4 + $0x180] sm:$0xff]
    %v692 = vld [vmem:[#allocation4 + $0x188] sm:$0xff]
    %v693 = vld [vmem:[#allocation4 + $0x190] sm:$0xff]
    %v694 = vld [vmem:[#allocation4 + $0x198] sm:$0xff]
    %v695 = vld [vmem:[#allocation4 + $0x1a0] sm:$0xff]
    %v696 = vld [vmem:[#allocation4 + $0x1a8] sm:$0xff]
    %v697 = vld [vmem:[#allocation4 + $0x1b0] sm:$0xff]
    %v698 = vld [vmem:[#allocation4 + $0x1b8] sm:$0xff]
    %v699 = vld [vmem:[#allocation4 + $0x1c0] sm:$0xff]
    %v700 = vld [vmem:[#allocation4 + $0x1c8] sm:$0xff]
    %v701 = vld [vmem:[#allocation4 + $0x1d0] sm:$0xff]
    %v702 = vld [vmem:[#allocation4 + $0x1d8] sm:$0xff]
    %v703 = vld [vmem:[#allocation4 + $0x1e0] sm:$0xff]
    %v704 = vld [vmem:[#allocation4 + $0x1e8] sm:$0xff]
    %v705 = vld [vmem:[#allocation4 + $0x1f0] sm:$0xff]
    %v706 = vld [vmem:[#allocation4 + $0x1f8] sm:$0xff]
    %v707 = vld [vmem:[%s5] sm:$0x3]
    %v709 = vperm.slane %v707, 0
    %v710 = vperm.slane %v707, 1
    %v777 = vunpack.c.l.b16 %v643
    %v778 = vunpack.c.h.b16 %v643
    %v779 = vunpack.c.l.b16 %v644
    %v780 = vunpack.c.h.b16 %v644
    %v781 = vunpack.c.l.b16 %v645
    %v782 = vunpack.c.h.b16 %v645
    %v783 = vunpack.c.l.b16 %v646
    %v784 = vunpack.c.h.b16 %v646
    %v785 = vunpack.c.l.b16 %v647
    %v786 = vunpack.c.h.b16 %v647
    %v787 = vunpack.c.l.b16 %v648
    %v788 = vunpack.c.h.b16 %v648
    %v789 = vunpack.c.l.b16 %v649
    %v790 = vunpack.c.h.b16 %v649
    %v791 = vunpack.c.l.b16 %v650
    %v792 = vunpack.c.h.b16 %v650
    %v793 = vunpack.c.l.b16 %v651
    %v794 = vunpack.c.h.b16 %v651
    %v795 = vunpack.c.l.b16 %v652
    %v796 = vunpack.c.h.b16 %v652
    %v797 = vunpack.c.l.b16 %v653
    %v798 = vunpack.c.h.b16 %v653
    %v799 = vunpack.c.l.b16 %v654
    %v800 = vunpack.c.h.b16 %v654
    %v801 = vunpack.c.l.b16 %v655
    %v802 = vunpack.c.h.b16 %v655
    %v803 = vunpack.c.l.b16 %v656
    %v804 = vunpack.c.h.b16 %v656
    %v805 = vunpack.c.l.b16 %v657
    %v806 = vunpack.c.h.b16 %v657
    %v807 = vunpack.c.l.b16 %v658
    %v808 = vunpack.c.h.b16 %v658
    %v809 = vunpack.c.l.b16 %v659
    %v810 = vunpack.c.h.b16 %v659
    %v811 = vunpack.c.l.b16 %v660
    %v812 = vunpack.c.h.b16 %v660
    %v813 = vunpack.c.l.b16 %v661
    %v814 = vunpack.c.h.b16 %v661
    %v815 = vunpack.c.l.b16 %v662
    %v816 = vunpack.c.h.b16 %v662
    %v817 = vunpack.c.l.b16 %v663
    %v818 = vunpack.c.h.b16 %v663
    %v819 = vunpack.c.l.b16 %v664
    %v820 = vunpack.c.h.b16 %v664
    %v821 = vunpack.c.l.b16 %v665
    %v822 = vunpack.c.h.b16 %v665
    %v823 = vunpack.c.l.b16 %v666
    %v824 = vunpack.c.h.b16 %v666
    %v825 = vunpack.c.l.b16 %v667
    %v826 = vunpack.c.h.b16 %v667
    %v827 = vunpack.c.l.b16 %v668
    %v828 = vunpack.c.h.b16 %v668
    %v829 = vunpack.c.l.b16 %v669
    %v830 = vunpack.c.h.b16 %v669
    %v831 = vunpack.c.l.b16 %v670
    %v832 = vunpack.c.h.b16 %v670
    %v833 = vunpack.c.l.b16 %v671
    %v834 = vunpack.c.h.b16 %v671
    %v835 = vunpack.c.l.b16 %v672
    %v836 = vunpack.c.h.b16 %v672
    %v837 = vunpack.c.l.b16 %v673
    %v838 = vunpack.c.h.b16 %v673
    %v839 = vunpack.c.l.b16 %v674
    %v840 = vunpack.c.h.b16 %v674
    %v841 = vunpack.c.l.b16 %v675
    %v842 = vunpack.c.h.b16 %v675
    %v843 = vunpack.c.l.b16 %v676
    %v844 = vunpack.c.h.b16 %v676
    %v845 = vunpack.c.l.b16 %v677
    %v846 = vunpack.c.h.b16 %v677
    %v847 = vunpack.c.l.b16 %v678
    %v848 = vunpack.c.h.b16 %v678
    %v849 = vunpack.c.l.b16 %v679
    %v850 = vunpack.c.h.b16 %v679
    %v851 = vunpack.c.l.b16 %v680
    %v852 = vunpack.c.h.b16 %v680
    %v853 = vunpack.c.l.b16 %v681
    %v854 = vunpack.c.h.b16 %v681
    %v855 = vunpack.c.l.b16 %v682
    %v856 = vunpack.c.h.b16 %v682
    %v857 = vunpack.c.l.b16 %v683
    %v858 = vunpack.c.h.b16 %v683
    %v859 = vunpack.c.l.b16 %v684
    %v860 = vunpack.c.h.b16 %v684
    %v861 = vunpack.c.l.b16 %v685
    %v862 = vunpack.c.h.b16 %v685
    %v863 = vunpack.c.l.b16 %v686
    %v864 = vunpack.c.h.b16 %v686
    %v865 = vunpack.c.l.b16 %v687
    %v866 = vunpack.c.h.b16 %v687
    %v867 = vunpack.c.l.b16 %v688
    %v868 = vunpack.c.h.b16 %v688
    %v869 = vunpack.c.l.b16 %v689
    %v870 = vunpack.c.h.b16 %v689
    %v871 = vunpack.c.l.b16 %v690
    %v872 = vunpack.c.h.b16 %v690
    %v873 = vunpack.c.l.b16 %v691
    %v874 = vunpack.c.h.b16 %v691
    %v875 = vunpack.c.l.b16 %v692
    %v876 = vunpack.c.h.b16 %v692
    %v877 = vunpack.c.l.b16 %v693
    %v878 = vunpack.c.h.b16 %v693
    %v879 = vunpack.c.l.b16 %v694
    %v880 = vunpack.c.h.b16 %v694
    %v881 = vunpack.c.l.b16 %v695
    %v882 = vunpack.c.h.b16 %v695
    %v883 = vunpack.c.l.b16 %v696
    %v884 = vunpack.c.h.b16 %v696
    %v885 = vunpack.c.l.b16 %v697
    %v886 = vunpack.c.h.b16 %v697
    %v887 = vunpack.c.l.b16 %v698
    %v888 = vunpack.c.h.b16 %v698
    %v889 = vunpack.c.l.b16 %v699
    %v890 = vunpack.c.h.b16 %v699
    %v891 = vunpack.c.l.b16 %v700
    %v892 = vunpack.c.h.b16 %v700
    %v893 = vunpack.c.l.b16 %v701
    %v894 = vunpack.c.h.b16 %v701
    %v895 = vunpack.c.l.b16 %v702
    %v896 = vunpack.c.h.b16 %v702
    %v897 = vunpack.c.l.b16 %v703
    %v898 = vunpack.c.h.b16 %v703
    %v899 = vunpack.c.l.b16 %v704
    %v900 = vunpack.c.h.b16 %v704
    %v901 = vunpack.c.l.b16 %v705
    %v902 = vunpack.c.h.b16 %v705
    %v903 = vunpack.c.l.b16 %v706
    %v904 = vunpack.c.h.b16 %v706
    %v905 = vpack.c.b16 %v779, %v777
    %v906 = vpack.c.b16 %v780, %v778
    %v907 = vpack.c.b16 %v783, %v781
    %v908 = vpack.c.b16 %v784, %v782
    %v909 = vpack.c.b16 %v787, %v785
    %v910 = vpack.c.b16 %v788, %v786
    %v911 = vpack.c.b16 %v791, %v789
    %v912 = vpack.c.b16 %v792, %v790
    %v913 = vpack.c.b16 %v795, %v793
    %v914 = vpack.c.b16 %v796, %v794
    %v915 = vpack.c.b16 %v799, %v797
    %v916 = vpack.c.b16 %v800, %v798
    %v917 = vpack.c.b16 %v803, %v801
    %v918 = vpack.c.b16 %v804, %v802
    %v919 = vpack.c.b16 %v807, %v805
    %v920 = vpack.c.b16 %v808, %v806
    %v921 = vpack.c.b16 %v811, %v809
    %v922 = vpack.c.b16 %v812, %v810
    %v923 = vpack.c.b16 %v815, %v813
    %v924 = vpack.c.b16 %v816, %v814
    %v925 = vpack.c.b16 %v819, %v817
    %v926 = vpack.c.b16 %v820, %v818
    %v927 = vpack.c.b16 %v823, %v821
    %v928 = vpack.c.b16 %v824, %v822
    %v929 = vpack.c.b16 %v827, %v825
    %v930 = vpack.c.b16 %v828, %v826
    %v931 = vpack.c.b16 %v831, %v829
    %v932 = vpack.c.b16 %v832, %v830
    %v933 = vpack.c.b16 %v835, %v833
    %v934 = vpack.c.b16 %v836, %v834
    %v935 = vpack.c.b16 %v839, %v837
    %v936 = vpack.c.b16 %v840, %v838
    %v937 = vpack.c.b16 %v843, %v841
    %v938 = vpack.c.b16 %v844, %v842
    %v939 = vpack.c.b16 %v847, %v845
    %v940 = vpack.c.b16 %v848, %v846
    %v941 = vpack.c.b16 %v851, %v849
    %v942 = vpack.c.b16 %v852, %v850
    %v943 = vpack.c.b16 %v855, %v853
    %v944 = vpack.c.b16 %v856, %v854
    %v945 = vpack.c.b16 %v859, %v857
    %v946 = vpack.c.b16 %v860, %v858
    %v947 = vpack.c.b16 %v863, %v861
    %v948 = vpack.c.b16 %v864, %v862
    %v949 = vpack.c.b16 %v867, %v865
    %v950 = vpack.c.b16 %v868, %v866
    %v951 = vpack.c.b16 %v871, %v869
    %v952 = vpack.c.b16 %v872, %v870
    %v953 = vpack.c.b16 %v875, %v873
    %v954 = vpack.c.b16 %v876, %v874
    %v955 = vpack.c.b16 %v879, %v877
    %v956 = vpack.c.b16 %v880, %v878
    %v957 = vpack.c.b16 %v883, %v881
    %v958 = vpack.c.b16 %v884, %v882
    %v959 = vpack.c.b16 %v887, %v885
    %v960 = vpack.c.b16 %v888, %v886
    %v961 = vpack.c.b16 %v891, %v889
    %v962 = vpack.c.b16 %v892, %v890
    %v963 = vpack.c.b16 %v895, %v893
    %v964 = vpack.c.b16 %v896, %v894
    %v965 = vpack.c.b16 %v899, %v897
    %v966 = vpack.c.b16 %v900, %v898
    %v967 = vpack.c.b16 %v903, %v901
    %v968 = vpack.c.b16 %v904, %v902
    %1033 = vmatpush.bf16.msra.mxu0 %v919
    %1034 = vmatpush.bf16.msra.mxu0 %v917
    %1035 = vmatpush.bf16.msra.mxu0 %v915
    %1036 = vmatpush.bf16.msra.mxu0 %v913
    %1037 = vmatpush.bf16.msra.mxu0 %v911
    %1038 = vmatpush.bf16.msra.mxu0 %v909
    %1039 = vmatpush.bf16.msra.mxu0 %v907
    %1040 = vmatpush.bf16.msra.mxu0 %v905
    %1041 = vmatmul.bf16.gmra.mxu0 %v639
    %v1042 = vpop.f32.mrf.mxu0
    %v1043 = vadd.f32 %v709, %v1042
    %v1044 = vpop.f32.mrf.mxu0
    %v1045 = vadd.f32 %v709, %v1044
    %1046 = vdwg.mxu0
    %1047 = vmatpush.bf16.msra.mxu0 %v935
    %1048 = vmatpush.bf16.msra.mxu0 %v933
    %1049 = vmatpush.bf16.msra.mxu0 %v931
    %1050 = vmatpush.bf16.msra.mxu0 %v929
    %1051 = vmatpush.bf16.msra.mxu0 %v927
    %1052 = vmatpush.bf16.msra.mxu0 %v925
    %1053 = vmatpush.bf16.msra.mxu0 %v923
    %1054 = vmatpush.bf16.msra.mxu0 %v921
    %1055 = vmatmul.bf16.gmra.mxu0 %v640
    %v1056 = vpop.f32.mrf.mxu0
    %v1057 = vadd.f32 %v1043, %v1056
    %v1058 = vpop.f32.mrf.mxu0
    %v1059 = vadd.f32 %v1045, %v1058
    %1060 = vdwg.mxu0
    %1061 = vmatpush.bf16.msra.mxu0 %v951
    %1062 = vmatpush.bf16.msra.mxu0 %v949
    %1063 = vmatpush.bf16.msra.mxu0 %v947
    %1064 = vmatpush.bf16.msra.mxu0 %v945
    %1065 = vmatpush.bf16.msra.mxu0 %v943
    %1066 = vmatpush.bf16.msra.mxu0 %v941
    %1067 = vmatpush.bf16.msra.mxu0 %v939
    %1068 = vmatpush.bf16.msra.mxu0 %v937
    %1069 = vmatmul.bf16.gmra.mxu0 %v641
    %v1070 = vpop.f32.mrf.mxu0
    %v1071 = vadd.f32 %v1057, %v1070
    %v1072 = vpop.f32.mrf.mxu0
    %v1073 = vadd.f32 %v1059, %v1072
    %1074 = vdwg.mxu0
    %1075 = vmatpush.bf16.msra.mxu0 %v967
    %1076 = vmatpush.bf16.msra.mxu0 %v965
    %1077 = vmatpush.bf16.msra.mxu0 %v963
    %1078 = vmatpush.bf16.msra.mxu0 %v961
    %1079 = vmatpush.bf16.msra.mxu0 %v959
    %1080 = vmatpush.bf16.msra.mxu0 %v957
    %1081 = vmatpush.bf16.msra.mxu0 %v955
    %1082 = vmatpush.bf16.msra.mxu0 %v953
    %1083 = vmatmul.bf16.gmra.mxu0 %v642
    %v1084 = vpop.f32.mrf.mxu0
    %v1085 = vadd.f32 %v1071, %v1084
    %v1086 = vpop.f32.mrf.mxu0
    %v1087 = vadd.f32 %v1073, %v1086
    %1088 = vdwg.mxu0
    %1089 = vmatpush.bf16.msra.mxu0 %v920
    %1090 = vmatpush.bf16.msra.mxu0 %v918
    %1091 = vmatpush.bf16.msra.mxu0 %v916
    %1092 = vmatpush.bf16.msra.mxu0 %v914
    %1093 = vmatpush.bf16.msra.mxu0 %v912
    %1094 = vmatpush.bf16.msra.mxu0 %v910
    %1095 = vmatpush.bf16.msra.mxu0 %v908
    %1096 = vmatpush.bf16.msra.mxu0 %v906
    %1097 = vmatmul.bf16.gmra.mxu0 %v639
    %v1098 = vpop.f32.mrf.mxu0
    %v1099 = vadd.f32 %v710, %v1098
    %v1100 = vpop.f32.mrf.mxu0
    %v1101 = vadd.f32 %v710, %v1100
    %1102 = vdwg.mxu0
    %1103 = vmatpush.bf16.msra.mxu0 %v936
    %1104 = vmatpush.bf16.msra.mxu0 %v934
    %1105 = vmatpush.bf16.msra.mxu0 %v932
    %1106 = vmatpush.bf16.msra.mxu0 %v930
    %1107 = vmatpush.bf16.msra.mxu0 %v928
    %1108 = vmatpush.bf16.msra.mxu0 %v926
    %1109 = vmatpush.bf16.msra.mxu0 %v924
    %1110 = vmatpush.bf16.msra.mxu0 %v922
    %1111 = vmatmul.bf16.gmra.mxu0 %v640
    %v1112 = vpop.f32.mrf.mxu0
    %v1113 = vadd.f32 %v1099, %v1112
    %v1114 = vpop.f32.mrf.mxu0
    %v1115 = vadd.f32 %v1101, %v1114
    %1116 = vdwg.mxu0
    %1117 = vmatpush.bf16.msra.mxu0 %v952
    %1118 = vmatpush.bf16.msra.mxu0 %v950
    %1119 = vmatpush.bf16.msra.mxu0 %v948
    %1120 = vmatpush.bf16.msra.mxu0 %v946
    %1121 = vmatpush.bf16.msra.mxu0 %v944
    %1122 = vmatpush.bf16.msra.mxu0 %v942
    %1123 = vmatpush.bf16.msra.mxu0 %v940
    %1124 = vmatpush.bf16.msra.mxu0 %v938
    %1125 = vmatmul.bf16.gmra.mxu0 %v641
    %v1126 = vpop.f32.mrf.mxu0
    %v1127 = vadd.f32 %v1113, %v1126
    %v1128 = vpop.f32.mrf.mxu0
    %v1129 = vadd.f32 %v1115, %v1128
    %1130 = vdwg.mxu0
    %1131 = vmatpush.bf16.msra.mxu0 %v968
    %1132 = vmatpush.bf16.msra.mxu0 %v966
    %1133 = vmatpush.bf16.msra.mxu0 %v964
    %1134 = vmatpush.bf16.msra.mxu0 %v962
    %1135 = vmatpush.bf16.msra.mxu0 %v960
    %1136 = vmatpush.bf16.msra.mxu0 %v958
    %1137 = vmatpush.bf16.msra.mxu0 %v956
    %1138 = vmatpush.bf16.msra.mxu0 %v954
    %1139 = vmatmul.bf16.gmra.mxu0 %v642
    %v1140 = vpop.f32.mrf.mxu0
    %v1141 = vadd.f32 %v1127, %v1140
    %v1142 = vpop.f32.mrf.mxu0
    %v1143 = vadd.f32 %v1129, %v1142
    %1144 = vdwg.mxu0
    %v1145 = vmax.f32 %v1085, 0.0
    %v1146 = vmax.f32 %v1141, 0.0
    %v1147 = vmax.f32 %v1087, 0.0
    %v1148 = vmax.f32 %v1143, 0.0
    %v1149 = vpack.c.bf16 %v1147, %v1145
    %v1150 = vpack.c.bf16 %v1148, %v1146
    %v1151 = vld [vmem:[%s6] sm:$0xf]
    %v1152 = vld [vmem:[%s6 + $0x4] sm:$0xf]
    %v1153 = vld [vmem:[%s6 + $0x8] sm:$0xf]
    %v1154 = vld [vmem:[%s6 + $0xc] sm:$0xf]
    %v1155 = vld [vmem:[%s6 + $0x10] sm:$0xf]
    %v1156 = vld [vmem:[%s6 + $0x14] sm:$0xf]
    %v1157 = vld [vmem:[%s6 + $0x18] sm:$0xf]
    %v1158 = vld [vmem:[%s6 + $0x1c] sm:$0xf]
    %v1159 = vld [vmem:[%s6 + $0x20] sm:$0xf]
    %v1160 = vld [vmem:[%s6 + $0x24] sm:$0xf]
    %v1161 = vld [vmem:[%s6 + $0x28] sm:$0xf]
    %v1162 = vld [vmem:[%s6 + $0x2c] sm:$0xf]
    %v1163 = vld [vmem:[%s6 + $0x30] sm:$0xf]
    %v1164 = vld [vmem:[%s6 + $0x34] sm:$0xf]
    %v1165 = vld [vmem:[%s6 + $0x38] sm:$0xf]
    %v1166 = vld [vmem:[%s6 + $0x3c] sm:$0xf]
    %v1167 = vld [vmem:[%s6 + $0x40] sm:$0xf]
    %v1168 = vld [vmem:[%s6 + $0x44] sm:$0xf]
    %v1169 = vld [vmem:[%s6 + $0x48] sm:$0xf]
    %v1170 = vld [vmem:[%s6 + $0x4c] sm:$0xf]
    %v1171 = vld [vmem:[%s6 + $0x50] sm:$0xf]
    %v1172 = vld [vmem:[%s6 + $0x54] sm:$0xf]
    %v1173 = vld [vmem:[%s6 + $0x58] sm:$0xf]
    %v1174 = vld [vmem:[%s6 + $0x5c] sm:$0xf]
    %v1175 = vld [vmem:[%s6 + $0x60] sm:$0xf]
    %v1176 = vld [vmem:[%s6 + $0x64] sm:$0xf]
    %v1177 = vld [vmem:[%s6 + $0x68] sm:$0xf]
    %v1178 = vld [vmem:[%s6 + $0x6c] sm:$0xf]
    %v1179 = vld [vmem:[%s6 + $0x70] sm:$0xf]
    %v1180 = vld [vmem:[%s6 + $0x74] sm:$0xf]
    %v1181 = vld [vmem:[%s6 + $0x78] sm:$0xf]
    %v1182 = vld [vmem:[%s6 + $0x7c] sm:$0xf]
    %v1183 = vld [vmem:[%s7] sm:$0x1]
    %v1185 = vperm.slane %v1183, 0
    %v1219 = vunpack.c.l.b16 %v1151
    %v1220 = vunpack.c.l.b16 %v1152
    %v1221 = vunpack.c.l.b16 %v1153
    %v1222 = vunpack.c.l.b16 %v1154
    %v1223 = vunpack.c.l.b16 %v1155
    %v1224 = vunpack.c.l.b16 %v1156
    %v1225 = vunpack.c.l.b16 %v1157
    %v1226 = vunpack.c.l.b16 %v1158
    %v1227 = vunpack.c.l.b16 %v1159
    %v1228 = vunpack.c.l.b16 %v1160
    %v1229 = vunpack.c.l.b16 %v1161
    %v1230 = vunpack.c.l.b16 %v1162
    %v1231 = vunpack.c.l.b16 %v1163
    %v1232 = vunpack.c.l.b16 %v1164
    %v1233 = vunpack.c.l.b16 %v1165
    %v1234 = vunpack.c.l.b16 %v1166
    %v1235 = vunpack.c.l.b16 %v1167
    %v1236 = vunpack.c.l.b16 %v1168
    %v1237 = vunpack.c.l.b16 %v1169
    %v1238 = vunpack.c.l.b16 %v1170
    %v1239 = vunpack.c.l.b16 %v1171
    %v1240 = vunpack.c.l.b16 %v1172
    %v1241 = vunpack.c.l.b16 %v1173
    %v1242 = vunpack.c.l.b16 %v1174
    %v1243 = vunpack.c.l.b16 %v1175
    %v1244 = vunpack.c.l.b16 %v1176
    %v1245 = vunpack.c.l.b16 %v1177
    %v1246 = vunpack.c.l.b16 %v1178
    %v1247 = vunpack.c.l.b16 %v1179
    %v1248 = vunpack.c.l.b16 %v1180
    %v1249 = vunpack.c.l.b16 %v1181
    %v1250 = vunpack.c.l.b16 %v1182
    %v1251 = vpack.c.b16 %v1220, %v1219
    %v1252 = vpack.c.b16 %v1222, %v1221
    %v1253 = vpack.c.b16 %v1224, %v1223
    %v1254 = vpack.c.b16 %v1226, %v1225
    %v1255 = vpack.c.b16 %v1228, %v1227
    %v1256 = vpack.c.b16 %v1230, %v1229
    %v1257 = vpack.c.b16 %v1232, %v1231
    %v1258 = vpack.c.b16 %v1234, %v1233
    %v1259 = vpack.c.b16 %v1236, %v1235
    %v1260 = vpack.c.b16 %v1238, %v1237
    %v1261 = vpack.c.b16 %v1240, %v1239
    %v1262 = vpack.c.b16 %v1242, %v1241
    %v1263 = vpack.c.b16 %v1244, %v1243
    %v1264 = vpack.c.b16 %v1246, %v1245
    %v1265 = vpack.c.b16 %v1248, %v1247
    %v1266 = vpack.c.b16 %v1250, %v1249
    %1283 = vmatpush.bf16.msra.mxu0 %v1258
    %1284 = vmatpush.bf16.msra.mxu0 %v1257
    %1285 = vmatpush.bf16.msra.mxu0 %v1256
    %1286 = vmatpush.bf16.msra.mxu0 %v1255
    %1287 = vmatpush.bf16.msra.mxu0 %v1254
    %1288 = vmatpush.bf16.msra.mxu0 %v1253
    %1289 = vmatpush.bf16.msra.mxu0 %v1252
    %1290 = vmatpush.bf16.msra.mxu0 %v1251
    %1291 = vmatmul.bf16.gmra.mxu0 %v1149
    %v1292 = vpop.f32.mrf.mxu0
    %v1293 = vadd.f32 %v1185, %v1292
    %v1294 = vpop.f32.mrf.mxu0
    %v1295 = vadd.f32 %v1185, %v1294
    %1296 = vdwg.mxu0
    %1297 = vmatpush.bf16.msra.mxu0 %v1266
    %1298 = vmatpush.bf16.msra.mxu0 %v1265
    %1299 = vmatpush.bf16.msra.mxu0 %v1264
    %1300 = vmatpush.bf16.msra.mxu0 %v1263
    %1301 = vmatpush.bf16.msra.mxu0 %v1262
    %1302 = vmatpush.bf16.msra.mxu0 %v1261
    %1303 = vmatpush.bf16.msra.mxu0 %v1260
    %1304 = vmatpush.bf16.msra.mxu0 %v1259
    %1305 = vmatmul.bf16.gmra.mxu0 %v1150
    %v1306 = vpop.f32.mrf.mxu0
    %v1307 = vadd.f32 %v1293, %v1306
    %v1308 = vpop.f32.mrf.mxu0
    %v1309 = vadd.f32 %v1295, %v1308
    %1310 = vdwg.mxu0
    %v1311 = vmul.f32 %v1307, 0.5
    %v1312 = vmul.f32 %v1309, 0.5
    %v1313 = vmul.f32 %v1311, 1.442695
    %v1314 = vpow.pop %v1313
    %v1315 = vmul.f32 %v1312, 1.442695
    %v1316 = vpow.pop %v1315
    %v1317 = vld [vmem:[%s1] sm:$0xff]
    %v1318 = vld [vmem:[%s1 + $0x8] sm:$0xff]
    %1321 = vrot.lane.b32.xlu0 %v1314, 64
    %v1322 = vpop.permute.xlu0 %1321
    %1323 = vrot.lane.b32.xlu0 %v1316, 64
    %v1324 = vpop.permute.xlu0 %1323
    %v1327 = vmul.f32 %v1317, %v1322
    %v1328 = vmul.f32 %v1318, %v1324
    %v1329 = vadd.f32 %v1307, %v1327
    %v1330 = vadd.f32 %v1309, %v1328
    %v1331 = vpack.c.bf16 %v1330, %v1329
    %v1332 = vld [vmem:[%s8] sm:$0xff]
    %v1333 = vld [vmem:[%s8 + $0x8] sm:$0xff]
    %v1334 = vld [vmem:[%s8 + $0x10] sm:$0xff]
    %v1335 = vld [vmem:[%s8 + $0x18] sm:$0xff]
    %v1336 = vld [vmem:[%s8 + $0x20] sm:$0xff]
    %v1337 = vld [vmem:[%s8 + $0x28] sm:$0xff]
    %v1338 = vld [vmem:[%s8 + $0x30] sm:$0xff]
    %v1339 = vld [vmem:[%s8 + $0x38] sm:$0xff]
    %v1340 = vld [vmem:[%s9] sm:$0x3]
    %v1342 = vperm.slane %v1340, 0
    %v1343 = vperm.slane %v1340, 1
    %v1354 = vunpack.c.l.b16 %v1332
    %v1355 = vunpack.c.h.b16 %v1332
    %v1356 = vunpack.c.l.b16 %v1333
    %v1357 = vunpack.c.h.b16 %v1333
    %v1358 = vunpack.c.l.b16 %v1334
    %v1359 = vunpack.c.h.b16 %v1334
    %v1360 = vunpack.c.l.b16 %v1335
    %v1361 = vunpack.c.h.b16 %v1335
    %v1362 = vunpack.c.l.b16 %v1336
    %v1363 = vunpack.c.h.b16 %v1336
    %v1364 = vunpack.c.l.b16 %v1337
    %v1365 = vunpack.c.h.b16 %v1337
    %v1366 = vunpack.c.l.b16 %v1338
    %v1367 = vunpack.c.h.b16 %v1338
    %v1368 = vunpack.c.l.b16 %v1339
    %v1369 = vunpack.c.h.b16 %v1339
    %v1370 = vpack.c.b16 %v1356, %v1354
    %v1371 = vpack.c.b16 %v1357, %v1355
    %v1372 = vpack.c.b16 %v1360, %v1358
    %v1373 = vpack.c.b16 %v1361, %v1359
    %v1374 = vpack.c.b16 %v1364, %v1362
    %v1375 = vpack.c.b16 %v1365, %v1363
    %v1376 = vpack.c.b16 %v1368, %v1366
    %v1377 = vpack.c.b16 %v1369, %v1367
    %vm1386 = vcmask 523264
    %v1388 = vsel %vm1386, %v1331, 0
    %1390 = vmatpush.bf16.msra.mxu0 0
    %1391 = vmatpush.bf16.msra.mxu0 0
    %1392 = vmatpush.bf16.msra.mxu0 0
    %1393 = vmatpush.bf16.msra.mxu0 0
    %1394 = vmatpush.bf16.msra.mxu0 %v1376
    %1395 = vmatpush.bf16.msra.mxu0 %v1374
    %1396 = vmatpush.bf16.msra.mxu0 %v1372
    %1397 = vmatpush.bf16.msra.mxu0 %v1370
    %1398 = vmatmul.bf16.gmra.mxu0 %v1388
    %v1399 = vpop.f32.mrf.mxu0
    %v1400 = vadd.f32 %v1342, %v1399
    %v1401 = vpop.f32.mrf.mxu0
    %v1402 = vadd.f32 %v1342, %v1401
    %1403 = vdwg.mxu0
    %1404 = vmatpush.bf16.msra.mxu0 0
    %1405 = vmatpush.bf16.msra.mxu0 0
    %1406 = vmatpush.bf16.msra.mxu0 0
    %1407 = vmatpush.bf16.msra.mxu0 0
    %1408 = vmatpush.bf16.msra.mxu0 %v1377
    %1409 = vmatpush.bf16.msra.mxu0 %v1375
    %1410 = vmatpush.bf16.msra.mxu0 %v1373
    %1411 = vmatpush.bf16.msra.mxu0 %v1371
    %1412 = vmatmul.bf16.gmra.mxu0 %v1388
    %v1413 = vpop.f32.mrf.mxu0
    %v1414 = vadd.f32 %v1343, %v1413
    %v1415 = vpop.f32.mrf.mxu0
    %v1416 = vadd.f32 %v1343, %v1415
    %1417 = vdwg.mxu0
    %v1418 = vmax.f32 %v1400, 0.0
    %v1419 = vmax.f32 %v1414, 0.0
    %v1420 = vmax.f32 %v1402, 0.0
    %v1421 = vmax.f32 %v1416, 0.0
    %v1422 = vpack.c.bf16 %v1420, %v1418
    %v1423 = vpack.c.bf16 %v1421, %v1419
    %v1424 = vld [vmem:[#allocation6] sm:$0xff]
    %v1425 = vld [vmem:[#allocation6 + $0x8] sm:$0xff]
    %v1426 = vld [vmem:[#allocation6 + $0x10] sm:$0xff]
    %v1427 = vld [vmem:[#allocation6 + $0x18] sm:$0xff]
    %v1428 = vld [vmem:[#allocation6 + $0x20] sm:$0xff]
    %v1429 = vld [vmem:[#allocation6 + $0x28] sm:$0xff]
    %v1430 = vld [vmem:[#allocation6 + $0x30] sm:$0xff]
    %v1431 = vld [vmem:[#allocation6 + $0x38] sm:$0xff]
    %v1432 = vld [vmem:[#allocation6 + $0x40] sm:$0xff]
    %v1433 = vld [vmem:[#allocation6 + $0x48] sm:$0xff]
    %v1434 = vld [vmem:[#allocation6 + $0x50] sm:$0xff]
    %v1435 = vld [vmem:[#allocation6 + $0x58] sm:$0xff]
    %v1436 = vld [vmem:[#allocation6 + $0x60] sm:$0xff]
    %v1437 = vld [vmem:[#allocation6 + $0x68] sm:$0xff]
    %v1438 = vld [vmem:[#allocation6 + $0x70] sm:$0xff]
    %v1439 = vld [vmem:[#allocation6 + $0x78] sm:$0xff]
    %v1440 = vld [vmem:[#allocation6 + $0x80] sm:$0xff]
    %v1441 = vld [vmem:[#allocation6 + $0x88] sm:$0xff]
    %v1442 = vld [vmem:[#allocation6 + $0x90] sm:$0xff]
    %v1443 = vld [vmem:[#allocation6 + $0x98] sm:$0xff]
    %v1444 = vld [vmem:[#allocation6 + $0xa0] sm:$0xff]
    %v1445 = vld [vmem:[#allocation6 + $0xa8] sm:$0xff]
    %v1446 = vld [vmem:[#allocation6 + $0xb0] sm:$0xff]
    %v1447 = vld [vmem:[#allocation6 + $0xb8] sm:$0xff]
    %v1448 = vld [vmem:[#allocation6 + $0xc0] sm:$0xff]
    %v1449 = vld [vmem:[#allocation6 + $0xc8] sm:$0xff]
    %v1450 = vld [vmem:[#allocation6 + $0xd0] sm:$0xff]
    %v1451 = vld [vmem:[#allocation6 + $0xd8] sm:$0xff]
    %v1452 = vld [vmem:[#allocation6 + $0xe0] sm:$0xff]
    %v1453 = vld [vmem:[#allocation6 + $0xe8] sm:$0xff]
    %v1454 = vld [vmem:[#allocation6 + $0xf0] sm:$0xff]
    %v1455 = vld [vmem:[#allocation6 + $0xf8] sm:$0xff]
    %v1456 = vld [vmem:[#allocation6 + $0x100] sm:$0xff]
    %v1457 = vld [vmem:[#allocation6 + $0x108] sm:$0xff]
    %v1458 = vld [vmem:[#allocation6 + $0x110] sm:$0xff]
    %v1459 = vld [vmem:[#allocation6 + $0x118] sm:$0xff]
    %v1460 = vld [vmem:[#allocation6 + $0x120] sm:$0xff]
    %v1461 = vld [vmem:[#allocation6 + $0x128] sm:$0xff]
    %v1462 = vld [vmem:[#allocation6 + $0x130] sm:$0xff]
    %v1463 = vld [vmem:[#allocation6 + $0x138] sm:$0xff]
    %v1464 = vld [vmem:[#allocation6 + $0x140] sm:$0xff]
    %v1465 = vld [vmem:[#allocation6 + $0x148] sm:$0xff]
    %v1466 = vld [vmem:[#allocation6 + $0x150] sm:$0xff]
    %v1467 = vld [vmem:[#allocation6 + $0x158] sm:$0xff]
    %v1468 = vld [vmem:[#allocation6 + $0x160] sm:$0xff]
    %v1469 = vld [vmem:[#allocation6 + $0x168] sm:$0xff]
    %v1470 = vld [vmem:[#allocation6 + $0x170] sm:$0xff]
    %v1471 = vld [vmem:[#allocation6 + $0x178] sm:$0xff]
    %v1472 = vld [vmem:[#allocation6 + $0x180] sm:$0xff]
    %v1473 = vld [vmem:[#allocation6 + $0x188] sm:$0xff]
    %v1474 = vld [vmem:[#allocation6 + $0x190] sm:$0xff]
    %v1475 = vld [vmem:[#allocation6 + $0x198] sm:$0xff]
    %v1476 = vld [vmem:[#allocation6 + $0x1a0] sm:$0xff]
    %v1477 = vld [vmem:[#allocation6 + $0x1a8] sm:$0xff]
    %v1478 = vld [vmem:[#allocation6 + $0x1b0] sm:$0xff]
    %v1479 = vld [vmem:[#allocation6 + $0x1b8] sm:$0xff]
    %v1480 = vld [vmem:[#allocation6 + $0x1c0] sm:$0xff]
    %v1481 = vld [vmem:[#allocation6 + $0x1c8] sm:$0xff]
    %v1482 = vld [vmem:[#allocation6 + $0x1d0] sm:$0xff]
    %v1483 = vld [vmem:[#allocation6 + $0x1d8] sm:$0xff]
    %v1484 = vld [vmem:[#allocation6 + $0x1e0] sm:$0xff]
    %v1485 = vld [vmem:[#allocation6 + $0x1e8] sm:$0xff]
    %v1486 = vld [vmem:[#allocation6 + $0x1f0] sm:$0xff]
    %v1487 = vld [vmem:[#allocation6 + $0x1f8] sm:$0xff]
    %v1488 = vld [vmem:[%s11] sm:$0xf]
    %v1490 = vperm.slane %v1488, 0
    %v1491 = vperm.slane %v1488, 1
    %v1492 = vperm.slane %v1488, 2
    %v1493 = vperm.slane %v1488, 3
    %v1562 = vunpack.c.l.b16 %v1424
    %v1563 = vunpack.c.h.b16 %v1424
    %v1564 = vunpack.c.l.b16 %v1425
    %v1565 = vunpack.c.h.b16 %v1425
    %v1566 = vunpack.c.l.b16 %v1426
    %v1567 = vunpack.c.h.b16 %v1426
    %v1568 = vunpack.c.l.b16 %v1427
    %v1569 = vunpack.c.h.b16 %v1427
    %v1570 = vunpack.c.l.b16 %v1428
    %v1571 = vunpack.c.h.b16 %v1428
    %v1572 = vunpack.c.l.b16 %v1429
    %v1573 = vunpack.c.h.b16 %v1429
    %v1574 = vunpack.c.l.b16 %v1430
    %v1575 = vunpack.c.h.b16 %v1430
    %v1576 = vunpack.c.l.b16 %v1431
    %v1577 = vunpack.c.h.b16 %v1431
    %v1578 = vunpack.c.l.b16 %v1432
    %v1579 = vunpack.c.h.b16 %v1432
    %v1580 = vunpack.c.l.b16 %v1433
    %v1581 = vunpack.c.h.b16 %v1433
    %v1582 = vunpack.c.l.b16 %v1434
    %v1583 = vunpack.c.h.b16 %v1434
    %v1584 = vunpack.c.l.b16 %v1435
    %v1585 = vunpack.c.h.b16 %v1435
    %v1586 = vunpack.c.l.b16 %v1436
    %v1587 = vunpack.c.h.b16 %v1436
    %v1588 = vunpack.c.l.b16 %v1437
    %v1589 = vunpack.c.h.b16 %v1437
    %v1590 = vunpack.c.l.b16 %v1438
    %v1591 = vunpack.c.h.b16 %v1438
    %v1592 = vunpack.c.l.b16 %v1439
    %v1593 = vunpack.c.h.b16 %v1439
    %v1594 = vunpack.c.l.b16 %v1440
    %v1595 = vunpack.c.h.b16 %v1440
    %v1596 = vunpack.c.l.b16 %v1441
    %v1597 = vunpack.c.h.b16 %v1441
    %v1598 = vunpack.c.l.b16 %v1442
    %v1599 = vunpack.c.h.b16 %v1442
    %v1600 = vunpack.c.l.b16 %v1443
    %v1601 = vunpack.c.h.b16 %v1443
    %v1602 = vunpack.c.l.b16 %v1444
    %v1603 = vunpack.c.h.b16 %v1444
    %v1604 = vunpack.c.l.b16 %v1445
    %v1605 = vunpack.c.h.b16 %v1445
    %v1606 = vunpack.c.l.b16 %v1446
    %v1607 = vunpack.c.h.b16 %v1446
    %v1608 = vunpack.c.l.b16 %v1447
    %v1609 = vunpack.c.h.b16 %v1447
    %v1610 = vunpack.c.l.b16 %v1448
    %v1611 = vunpack.c.h.b16 %v1448
    %v1612 = vunpack.c.l.b16 %v1449
    %v1613 = vunpack.c.h.b16 %v1449
    %v1614 = vunpack.c.l.b16 %v1450
    %v1615 = vunpack.c.h.b16 %v1450
    %v1616 = vunpack.c.l.b16 %v1451
    %v1617 = vunpack.c.h.b16 %v1451
    %v1618 = vunpack.c.l.b16 %v1452
    %v1619 = vunpack.c.h.b16 %v1452
    %v1620 = vunpack.c.l.b16 %v1453
    %v1621 = vunpack.c.h.b16 %v1453
    %v1622 = vunpack.c.l.b16 %v1454
    %v1623 = vunpack.c.h.b16 %v1454
    %v1624 = vunpack.c.l.b16 %v1455
    %v1625 = vunpack.c.h.b16 %v1455
    %v1626 = vunpack.c.l.b16 %v1456
    %v1627 = vunpack.c.h.b16 %v1456
    %v1628 = vunpack.c.l.b16 %v1457
    %v1629 = vunpack.c.h.b16 %v1457
    %v1630 = vunpack.c.l.b16 %v1458
    %v1631 = vunpack.c.h.b16 %v1458
    %v1632 = vunpack.c.l.b16 %v1459
    %v1633 = vunpack.c.h.b16 %v1459
    %v1634 = vunpack.c.l.b16 %v1460
    %v1635 = vunpack.c.h.b16 %v1460
    %v1636 = vunpack.c.l.b16 %v1461
    %v1637 = vunpack.c.h.b16 %v1461
    %v1638 = vunpack.c.l.b16 %v1462
    %v1639 = vunpack.c.h.b16 %v1462
    %v1640 = vunpack.c.l.b16 %v1463
    %v1641 = vunpack.c.h.b16 %v1463
    %v1642 = vunpack.c.l.b16 %v1464
    %v1643 = vunpack.c.h.b16 %v1464
    %v1644 = vunpack.c.l.b16 %v1465
    %v1645 = vunpack.c.h.b16 %v1465
    %v1646 = vunpack.c.l.b16 %v1466
    %v1647 = vunpack.c.h.b16 %v1466
    %v1648 = vunpack.c.l.b16 %v1467
    %v1649 = vunpack.c.h.b16 %v1467
    %v1650 = vunpack.c.l.b16 %v1468
    %v1651 = vunpack.c.h.b16 %v1468
    %v1652 = vunpack.c.l.b16 %v1469
    %v1653 = vunpack.c.h.b16 %v1469
    %v1654 = vunpack.c.l.b16 %v1470
    %v1655 = vunpack.c.h.b16 %v1470
    %v1656 = vunpack.c.l.b16 %v1471
    %v1657 = vunpack.c.h.b16 %v1471
    %v1658 = vunpack.c.l.b16 %v1472
    %v1659 = vunpack.c.h.b16 %v1472
    %v1660 = vunpack.c.l.b16 %v1473
    %v1661 = vunpack.c.h.b16 %v1473
    %v1662 = vunpack.c.l.b16 %v1474
    %v1663 = vunpack.c.h.b16 %v1474
    %v1664 = vunpack.c.l.b16 %v1475
    %v1665 = vunpack.c.h.b16 %v1475
    %v1666 = vunpack.c.l.b16 %v1476
    %v1667 = vunpack.c.h.b16 %v1476
    %v1668 = vunpack.c.l.b16 %v1477
    %v1669 = vunpack.c.h.b16 %v1477
    %v1670 = vunpack.c.l.b16 %v1478
    %v1671 = vunpack.c.h.b16 %v1478
    %v1672 = vunpack.c.l.b16 %v1479
    %v1673 = vunpack.c.h.b16 %v1479
    %v1674 = vunpack.c.l.b16 %v1480
    %v1675 = vunpack.c.h.b16 %v1480
    %v1676 = vunpack.c.l.b16 %v1481
    %v1677 = vunpack.c.h.b16 %v1481
    %v1678 = vunpack.c.l.b16 %v1482
    %v1679 = vunpack.c.h.b16 %v1482
    %v1680 = vunpack.c.l.b16 %v1483
    %v1681 = vunpack.c.h.b16 %v1483
    %v1682 = vunpack.c.l.b16 %v1484
    %v1683 = vunpack.c.h.b16 %v1484
    %v1684 = vunpack.c.l.b16 %v1485
    %v1685 = vunpack.c.h.b16 %v1485
    %v1686 = vunpack.c.l.b16 %v1486
    %v1687 = vunpack.c.h.b16 %v1486
    %v1688 = vunpack.c.l.b16 %v1487
    %v1689 = vunpack.c.h.b16 %v1487
    %v1690 = vpack.c.b16 %v1566, %v1562
    %v1691 = vpack.c.b16 %v1567, %v1563
    %v1692 = vpack.c.b16 %v1568, %v1564
    %v1693 = vpack.c.b16 %v1569, %v1565
    %v1694 = vpack.c.b16 %v1574, %v1570
    %v1695 = vpack.c.b16 %v1575, %v1571
    %v1696 = vpack.c.b16 %v1576, %v1572
    %v1697 = vpack.c.b16 %v1577, %v1573
    %v1698 = vpack.c.b16 %v1582, %v1578
    %v1699 = vpack.c.b16 %v1583, %v1579
    %v1700 = vpack.c.b16 %v1584, %v1580
    %v1701 = vpack.c.b16 %v1585, %v1581
    %v1702 = vpack.c.b16 %v1590, %v1586
    %v1703 = vpack.c.b16 %v1591, %v1587
    %v1704 = vpack.c.b16 %v1592, %v1588
    %v1705 = vpack.c.b16 %v1593, %v1589
    %v1706 = vpack.c.b16 %v1598, %v1594
    %v1707 = vpack.c.b16 %v1599, %v1595
    %v1708 = vpack.c.b16 %v1600, %v1596
    %v1709 = vpack.c.b16 %v1601, %v1597
    %v1710 = vpack.c.b16 %v1606, %v1602
    %v1711 = vpack.c.b16 %v1607, %v1603
    %v1712 = vpack.c.b16 %v1608, %v1604
    %v1713 = vpack.c.b16 %v1609, %v1605
    %v1714 = vpack.c.b16 %v1614, %v1610
    %v1715 = vpack.c.b16 %v1615, %v1611
    %v1716 = vpack.c.b16 %v1616, %v1612
    %v1717 = vpack.c.b16 %v1617, %v1613
    %v1718 = vpack.c.b16 %v1622, %v1618
    %v1719 = vpack.c.b16 %v1623, %v1619
    %v1720 = vpack.c.b16 %v1624, %v1620
    %v1721 = vpack.c.b16 %v1625, %v1621
    %v1722 = vpack.c.b16 %v1630, %v1626
    %v1723 = vpack.c.b16 %v1631, %v1627
    %v1724 = vpack.c.b16 %v1632, %v1628
    %v1725 = vpack.c.b16 %v1633, %v1629
    %v1726 = vpack.c.b16 %v1638, %v1634
    %v1727 = vpack.c.b16 %v1639, %v1635
    %v1728 = vpack.c.b16 %v1640, %v1636
    %v1729 = vpack.c.b16 %v1641, %v1637
    %v1730 = vpack.c.b16 %v1646, %v1642
    %v1731 = vpack.c.b16 %v1647, %v1643
    %v1732 = vpack.c.b16 %v1648, %v1644
    %v1733 = vpack.c.b16 %v1649, %v1645
    %v1734 = vpack.c.b16 %v1654, %v1650
    %v1735 = vpack.c.b16 %v1655, %v1651
    %v1736 = vpack.c.b16 %v1656, %v1652
    %v1737 = vpack.c.b16 %v1657, %v1653
    %v1738 = vpack.c.b16 %v1662, %v1658
    %v1739 = vpack.c.b16 %v1663, %v1659
    %v1740 = vpack.c.b16 %v1664, %v1660
    %v1741 = vpack.c.b16 %v1665, %v1661
    %v1742 = vpack.c.b16 %v1670, %v1666
    %v1743 = vpack.c.b16 %v1671, %v1667
    %v1744 = vpack.c.b16 %v1672, %v1668
    %v1745 = vpack.c.b16 %v1673, %v1669
    %v1746 = vpack.c.b16 %v1678, %v1674
    %v1747 = vpack.c.b16 %v1679, %v1675
    %v1748 = vpack.c.b16 %v1680, %v1676
    %v1749 = vpack.c.b16 %v1681, %v1677
    %v1750 = vpack.c.b16 %v1686, %v1682
    %v1751 = vpack.c.b16 %v1687, %v1683
    %v1752 = vpack.c.b16 %v1688, %v1684
    %v1753 = vpack.c.b16 %v1689, %v1685
    %1818 = vmatpush.bf16.msra.mxu0 %v1718
    %1819 = vmatpush.bf16.msra.mxu0 %v1714
    %1820 = vmatpush.bf16.msra.mxu0 %v1710
    %1821 = vmatpush.bf16.msra.mxu0 %v1706
    %1822 = vmatpush.bf16.msra.mxu0 %v1702
    %1823 = vmatpush.bf16.msra.mxu0 %v1698
    %1824 = vmatpush.bf16.msra.mxu0 %v1694
    %1825 = vmatpush.bf16.msra.mxu0 %v1690
    %1826 = vmatmul.bf16.gmra.mxu0 %v1422
    %v1827 = vpop.f32.mrf.mxu0
    %v1828 = vadd.f32 %v1490, %v1827
    %v1829 = vpop.f32.mrf.mxu0
    %v1830 = vadd.f32 %v1490, %v1829
    %1831 = vdwg.mxu0
    %1832 = vmatpush.bf16.msra.mxu0 %v1750
    %1833 = vmatpush.bf16.msra.mxu0 %v1746
    %1834 = vmatpush.bf16.msra.mxu0 %v1742
    %1835 = vmatpush.bf16.msra.mxu0 %v1738
    %1836 = vmatpush.bf16.msra.mxu0 %v1734
    %1837 = vmatpush.bf16.msra.mxu0 %v1730
    %1838 = vmatpush.bf16.msra.mxu0 %v1726
    %1839 = vmatpush.bf16.msra.mxu0 %v1722
    %1840 = vmatmul.bf16.gmra.mxu0 %v1423
    %v1841 = vpop.f32.mrf.mxu0
    %v1842 = vadd.f32 %v1828, %v1841
    %v1843 = vpop.f32.mrf.mxu0
    %v1844 = vadd.f32 %v1830, %v1843
    %1845 = vdwg.mxu0
    %1846 = vmatpush.bf16.msra.mxu0 %v1719
    %1847 = vmatpush.bf16.msra.mxu0 %v1715
    %1848 = vmatpush.bf16.msra.mxu0 %v1711
    %1849 = vmatpush.bf16.msra.mxu0 %v1707
    %1850 = vmatpush.bf16.msra.mxu0 %v1703
    %1851 = vmatpush.bf16.msra.mxu0 %v1699
    %1852 = vmatpush.bf16.msra.mxu0 %v1695
    %1853 = vmatpush.bf16.msra.mxu0 %v1691
    %1854 = vmatmul.bf16.gmra.mxu0 %v1422
    %v1855 = vpop.f32.mrf.mxu0
    %v1856 = vadd.f32 %v1491, %v1855
    %v1857 = vpop.f32.mrf.mxu0
    %v1858 = vadd.f32 %v1491, %v1857
    %1859 = vdwg.mxu0
    %1860 = vmatpush.bf16.msra.mxu0 %v1751
    %1861 = vmatpush.bf16.msra.mxu0 %v1747
    %1862 = vmatpush.bf16.msra.mxu0 %v1743
    %1863 = vmatpush.bf16.msra.mxu0 %v1739
    %1864 = vmatpush.bf16.msra.mxu0 %v1735
    %1865 = vmatpush.bf16.msra.mxu0 %v1731
    %1866 = vmatpush.bf16.msra.mxu0 %v1727
    %1867 = vmatpush.bf16.msra.mxu0 %v1723
    %1868 = vmatmul.bf16.gmra.mxu0 %v1423
    %v1869 = vpop.f32.mrf.mxu0
    %v1870 = vadd.f32 %v1856, %v1869
    %v1871 = vpop.f32.mrf.mxu0
    %v1872 = vadd.f32 %v1858, %v1871
    %1873 = vdwg.mxu0
    %1874 = vmatpush.bf16.msra.mxu0 %v1720
    %1875 = vmatpush.bf16.msra.mxu0 %v1716
    %1876 = vmatpush.bf16.msra.mxu0 %v1712
    %1877 = vmatpush.bf16.msra.mxu0 %v1708
    %1878 = vmatpush.bf16.msra.mxu0 %v1704
    %1879 = vmatpush.bf16.msra.mxu0 %v1700
    %1880 = vmatpush.bf16.msra.mxu0 %v1696
    %1881 = vmatpush.bf16.msra.mxu0 %v1692
    %1882 = vmatmul.bf16.gmra.mxu0 %v1422
    %v1883 = vpop.f32.mrf.mxu0
    %v1884 = vadd.f32 %v1492, %v1883
    %v1885 = vpop.f32.mrf.mxu0
    %v1886 = vadd.f32 %v1492, %v1885
    %1887 = vdwg.mxu0
    %1888 = vmatpush.bf16.msra.mxu0 %v1752
    %1889 = vmatpush.bf16.msra.mxu0 %v1748
    %1890 = vmatpush.bf16.msra.mxu0 %v1744
    %1891 = vmatpush.bf16.msra.mxu0 %v1740
    %1892 = vmatpush.bf16.msra.mxu0 %v1736
    %1893 = vmatpush.bf16.msra.mxu0 %v1732
    %1894 = vmatpush.bf16.msra.mxu0 %v1728
    %1895 = vmatpush.bf16.msra.mxu0 %v1724
    %1896 = vmatmul.bf16.gmra.mxu0 %v1423
    %v1897 = vpop.f32.mrf.mxu0
    %v1898 = vadd.f32 %v1884, %v1897
    %v1899 = vpop.f32.mrf.mxu0
    %v1900 = vadd.f32 %v1886, %v1899
    %1901 = vdwg.mxu0
    %1902 = vmatpush.bf16.msra.mxu0 %v1721
    %1903 = vmatpush.bf16.msra.mxu0 %v1717
    %1904 = vmatpush.bf16.msra.mxu0 %v1713
    %1905 = vmatpush.bf16.msra.mxu0 %v1709
    %1906 = vmatpush.bf16.msra.mxu0 %v1705
    %1907 = vmatpush.bf16.msra.mxu0 %v1701
    %1908 = vmatpush.bf16.msra.mxu0 %v1697
    %1909 = vmatpush.bf16.msra.mxu0 %v1693
    %1910 = vmatmul.bf16.gmra.mxu0 %v1422
    %v1911 = vpop.f32.mrf.mxu0
    %v1912 = vadd.f32 %v1493, %v1911
    %v1913 = vpop.f32.mrf.mxu0
    %v1914 = vadd.f32 %v1493, %v1913
    %1915 = vdwg.mxu0
    %1916 = vmatpush.bf16.msra.mxu0 %v1753
    %1917 = vmatpush.bf16.msra.mxu0 %v1749
    %1918 = vmatpush.bf16.msra.mxu0 %v1745
    %1919 = vmatpush.bf16.msra.mxu0 %v1741
    %1920 = vmatpush.bf16.msra.mxu0 %v1737
    %1921 = vmatpush.bf16.msra.mxu0 %v1733
    %1922 = vmatpush.bf16.msra.mxu0 %v1729
    %1923 = vmatpush.bf16.msra.mxu0 %v1725
    %1924 = vmatmul.bf16.gmra.mxu0 %v1423
    %v1925 = vpop.f32.mrf.mxu0
    %v1926 = vadd.f32 %v1912, %v1925
    %v1927 = vpop.f32.mrf.mxu0
    %v1928 = vadd.f32 %v1914, %v1927
    %1929 = vdwg.mxu0
    %v1930 = vmax.f32 %v1842, 0.0
    %v1931 = vmax.f32 %v1870, 0.0
    %v1932 = vmax.f32 %v1898, 0.0
    %v1933 = vmax.f32 %v1926, 0.0
    %v1934 = vmax.f32 %v1844, 0.0
    %v1935 = vmax.f32 %v1872, 0.0
    %v1936 = vmax.f32 %v1900, 0.0
    %v1937 = vmax.f32 %v1928, 0.0
    %v1938 = vpack.c.bf16 %v1934, %v1930
    %v1939 = vpack.c.bf16 %v1935, %v1931
    %v1940 = vpack.c.bf16 %v1936, %v1932
    %v1941 = vpack.c.bf16 %v1937, %v1933
    %v1942 = vld [vmem:[#allocation7] sm:$0xff]
    %v1943 = vld [vmem:[#allocation7 + $0x8] sm:$0xff]
    %v1944 = vld [vmem:[#allocation7 + $0x10] sm:$0xff]
    %v1945 = vld [vmem:[#allocation7 + $0x18] sm:$0xff]
    %v1946 = vld [vmem:[#allocation7 + $0x20] sm:$0xff]
    %v1947 = vld [vmem:[#allocation7 + $0x28] sm:$0xff]
    %v1948 = vld [vmem:[#allocation7 + $0x30] sm:$0xff]
    %v1949 = vld [vmem:[#allocation7 + $0x38] sm:$0xff]
    %v1950 = vld [vmem:[#allocation7 + $0x40] sm:$0xff]
    %v1951 = vld [vmem:[#allocation7 + $0x48] sm:$0xff]
    %v1952 = vld [vmem:[#allocation7 + $0x50] sm:$0xff]
    %v1953 = vld [vmem:[#allocation7 + $0x58] sm:$0xff]
    %v1954 = vld [vmem:[#allocation7 + $0x60] sm:$0xff]
    %v1955 = vld [vmem:[#allocation7 + $0x68] sm:$0xff]
    %v1956 = vld [vmem:[#allocation7 + $0x70] sm:$0xff]
    %v1957 = vld [vmem:[#allocation7 + $0x78] sm:$0xff]
    %v1958 = vld [vmem:[#allocation7 + $0x80] sm:$0xff]
    %v1959 = vld [vmem:[#allocation7 + $0x88] sm:$0xff]
    %v1960 = vld [vmem:[#allocation7 + $0x90] sm:$0xff]
    %v1961 = vld [vmem:[#allocation7 + $0x98] sm:$0xff]
    %v1962 = vld [vmem:[#allocation7 + $0xa0] sm:$0xff]
    %v1963 = vld [vmem:[#allocation7 + $0xa8] sm:$0xff]
    %v1964 = vld [vmem:[#allocation7 + $0xb0] sm:$0xff]
    %v1965 = vld [vmem:[#allocation7 + $0xb8] sm:$0xff]
    %v1966 = vld [vmem:[#allocation7 + $0xc0] sm:$0xff]
    %v1967 = vld [vmem:[#allocation7 + $0xc8] sm:$0xff]
    %v1968 = vld [vmem:[#allocation7 + $0xd0] sm:$0xff]
    %v1969 = vld [vmem:[#allocation7 + $0xd8] sm:$0xff]
    %v1970 = vld [vmem:[#allocation7 + $0xe0] sm:$0xff]
    %v1971 = vld [vmem:[#allocation7 + $0xe8] sm:$0xff]
    %v1972 = vld [vmem:[#allocation7 + $0xf0] sm:$0xff]
    %v1973 = vld [vmem:[#allocation7 + $0xf8] sm:$0xff]
    %v1974 = vld [vmem:[#allocation7 + $0x100] sm:$0xff]
    %v1975 = vld [vmem:[#allocation7 + $0x108] sm:$0xff]
    %v1976 = vld [vmem:[#allocation7 + $0x110] sm:$0xff]
    %v1977 = vld [vmem:[#allocation7 + $0x118] sm:$0xff]
    %v1978 = vld [vmem:[#allocation7 + $0x120] sm:$0xff]
    %v1979 = vld [vmem:[#allocation7 + $0x128] sm:$0xff]
    %v1980 = vld [vmem:[#allocation7 + $0x130] sm:$0xff]
    %v1981 = vld [vmem:[#allocation7 + $0x138] sm:$0xff]
    %v1982 = vld [vmem:[#allocation7 + $0x140] sm:$0xff]
    %v1983 = vld [vmem:[#allocation7 + $0x148] sm:$0xff]
    %v1984 = vld [vmem:[#allocation7 + $0x150] sm:$0xff]
    %v1985 = vld [vmem:[#allocation7 + $0x158] sm:$0xff]
    %v1986 = vld [vmem:[#allocation7 + $0x160] sm:$0xff]
    %v1987 = vld [vmem:[#allocation7 + $0x168] sm:$0xff]
    %v1988 = vld [vmem:[#allocation7 + $0x170] sm:$0xff]
    %v1989 = vld [vmem:[#allocation7 + $0x178] sm:$0xff]
    %v1990 = vld [vmem:[#allocation7 + $0x180] sm:$0xff]
    %v1991 = vld [vmem:[#allocation7 + $0x188] sm:$0xff]
    %v1992 = vld [vmem:[#allocation7 + $0x190] sm:$0xff]
    %v1993 = vld [vmem:[#allocation7 + $0x198] sm:$0xff]
    %v1994 = vld [vmem:[#allocation7 + $0x1a0] sm:$0xff]
    %v1995 = vld [vmem:[#allocation7 + $0x1a8] sm:$0xff]
    %v1996 = vld [vmem:[#allocation7 + $0x1b0] sm:$0xff]
    %v1997 = vld [vmem:[#allocation7 + $0x1b8] sm:$0xff]
    %v1998 = vld [vmem:[#allocation7 + $0x1c0] sm:$0xff]
    %v1999 = vld [vmem:[#allocation7 + $0x1c8] sm:$0xff]
    %v2000 = vld [vmem:[#allocation7 + $0x1d0] sm:$0xff]
    %v2001 = vld [vmem:[#allocation7 + $0x1d8] sm:$0xff]
    %v2002 = vld [vmem:[#allocation7 + $0x1e0] sm:$0xff]
    %v2003 = vld [vmem:[#allocation7 + $0x1e8] sm:$0xff]
    %v2004 = vld [vmem:[#allocation7 + $0x1f0] sm:$0xff]
    %v2005 = vld [vmem:[#allocation7 + $0x1f8] sm:$0xff]
    %v2006 = vld [vmem:[%s13] sm:$0x3]
    %v2008 = vperm.slane %v2006, 0
    %v2009 = vperm.slane %v2006, 1
    %v2076 = vunpack.c.l.b16 %v1942
    %v2077 = vunpack.c.h.b16 %v1942
    %v2078 = vunpack.c.l.b16 %v1943
    %v2079 = vunpack.c.h.b16 %v1943
    %v2080 = vunpack.c.l.b16 %v1944
    %v2081 = vunpack.c.h.b16 %v1944
    %v2082 = vunpack.c.l.b16 %v1945
    %v2083 = vunpack.c.h.b16 %v1945
    %v2084 = vunpack.c.l.b16 %v1946
    %v2085 = vunpack.c.h.b16 %v1946
    %v2086 = vunpack.c.l.b16 %v1947
    %v2087 = vunpack.c.h.b16 %v1947
    %v2088 = vunpack.c.l.b16 %v1948
    %v2089 = vunpack.c.h.b16 %v1948
    %v2090 = vunpack.c.l.b16 %v1949
    %v2091 = vunpack.c.h.b16 %v1949
    %v2092 = vunpack.c.l.b16 %v1950
    %v2093 = vunpack.c.h.b16 %v1950
    %v2094 = vunpack.c.l.b16 %v1951
    %v2095 = vunpack.c.h.b16 %v1951
    %v2096 = vunpack.c.l.b16 %v1952
    %v2097 = vunpack.c.h.b16 %v1952
    %v2098 = vunpack.c.l.b16 %v1953
    %v2099 = vunpack.c.h.b16 %v1953
    %v2100 = vunpack.c.l.b16 %v1954
    %v2101 = vunpack.c.h.b16 %v1954
    %v2102 = vunpack.c.l.b16 %v1955
    %v2103 = vunpack.c.h.b16 %v1955
    %v2104 = vunpack.c.l.b16 %v1956
    %v2105 = vunpack.c.h.b16 %v1956
    %v2106 = vunpack.c.l.b16 %v1957
    %v2107 = vunpack.c.h.b16 %v1957
    %v2108 = vunpack.c.l.b16 %v1958
    %v2109 = vunpack.c.h.b16 %v1958
    %v2110 = vunpack.c.l.b16 %v1959
    %v2111 = vunpack.c.h.b16 %v1959
    %v2112 = vunpack.c.l.b16 %v1960
    %v2113 = vunpack.c.h.b16 %v1960
    %v2114 = vunpack.c.l.b16 %v1961
    %v2115 = vunpack.c.h.b16 %v1961
    %v2116 = vunpack.c.l.b16 %v1962
    %v2117 = vunpack.c.h.b16 %v1962
    %v2118 = vunpack.c.l.b16 %v1963
    %v2119 = vunpack.c.h.b16 %v1963
    %v2120 = vunpack.c.l.b16 %v1964
    %v2121 = vunpack.c.h.b16 %v1964
    %v2122 = vunpack.c.l.b16 %v1965
    %v2123 = vunpack.c.h.b16 %v1965
    %v2124 = vunpack.c.l.b16 %v1966
    %v2125 = vunpack.c.h.b16 %v1966
    %v2126 = vunpack.c.l.b16 %v1967
    %v2127 = vunpack.c.h.b16 %v1967
    %v2128 = vunpack.c.l.b16 %v1968
    %v2129 = vunpack.c.h.b16 %v1968
    %v2130 = vunpack.c.l.b16 %v1969
    %v2131 = vunpack.c.h.b16 %v1969
    %v2132 = vunpack.c.l.b16 %v1970
    %v2133 = vunpack.c.h.b16 %v1970
    %v2134 = vunpack.c.l.b16 %v1971
    %v2135 = vunpack.c.h.b16 %v1971
    %v2136 = vunpack.c.l.b16 %v1972
    %v2137 = vunpack.c.h.b16 %v1972
    %v2138 = vunpack.c.l.b16 %v1973
    %v2139 = vunpack.c.h.b16 %v1973
    %v2140 = vunpack.c.l.b16 %v1974
    %v2141 = vunpack.c.h.b16 %v1974
    %v2142 = vunpack.c.l.b16 %v1975
    %v2143 = vunpack.c.h.b16 %v1975
    %v2144 = vunpack.c.l.b16 %v1976
    %v2145 = vunpack.c.h.b16 %v1976
    %v2146 = vunpack.c.l.b16 %v1977
    %v2147 = vunpack.c.h.b16 %v1977
    %v2148 = vunpack.c.l.b16 %v1978
    %v2149 = vunpack.c.h.b16 %v1978
    %v2150 = vunpack.c.l.b16 %v1979
    %v2151 = vunpack.c.h.b16 %v1979
    %v2152 = vunpack.c.l.b16 %v1980
    %v2153 = vunpack.c.h.b16 %v1980
    %v2154 = vunpack.c.l.b16 %v1981
    %v2155 = vunpack.c.h.b16 %v1981
    %v2156 = vunpack.c.l.b16 %v1982
    %v2157 = vunpack.c.h.b16 %v1982
    %v2158 = vunpack.c.l.b16 %v1983
    %v2159 = vunpack.c.h.b16 %v1983
    %v2160 = vunpack.c.l.b16 %v1984
    %v2161 = vunpack.c.h.b16 %v1984
    %v2162 = vunpack.c.l.b16 %v1985
    %v2163 = vunpack.c.h.b16 %v1985
    %v2164 = vunpack.c.l.b16 %v1986
    %v2165 = vunpack.c.h.b16 %v1986
    %v2166 = vunpack.c.l.b16 %v1987
    %v2167 = vunpack.c.h.b16 %v1987
    %v2168 = vunpack.c.l.b16 %v1988
    %v2169 = vunpack.c.h.b16 %v1988
    %v2170 = vunpack.c.l.b16 %v1989
    %v2171 = vunpack.c.h.b16 %v1989
    %v2172 = vunpack.c.l.b16 %v1990
    %v2173 = vunpack.c.h.b16 %v1990
    %v2174 = vunpack.c.l.b16 %v1991
    %v2175 = vunpack.c.h.b16 %v1991
    %v2176 = vunpack.c.l.b16 %v1992
    %v2177 = vunpack.c.h.b16 %v1992
    %v2178 = vunpack.c.l.b16 %v1993
    %v2179 = vunpack.c.h.b16 %v1993
    %v2180 = vunpack.c.l.b16 %v1994
    %v2181 = vunpack.c.h.b16 %v1994
    %v2182 = vunpack.c.l.b16 %v1995
    %v2183 = vunpack.c.h.b16 %v1995
    %v2184 = vunpack.c.l.b16 %v1996
    %v2185 = vunpack.c.h.b16 %v1996
    %v2186 = vunpack.c.l.b16 %v1997
    %v2187 = vunpack.c.h.b16 %v1997
    %v2188 = vunpack.c.l.b16 %v1998
    %v2189 = vunpack.c.h.b16 %v1998
    %v2190 = vunpack.c.l.b16 %v1999
    %v2191 = vunpack.c.h.b16 %v1999
    %v2192 = vunpack.c.l.b16 %v2000
    %v2193 = vunpack.c.h.b16 %v2000
    %v2194 = vunpack.c.l.b16 %v2001
    %v2195 = vunpack.c.h.b16 %v2001
    %v2196 = vunpack.c.l.b16 %v2002
    %v2197 = vunpack.c.h.b16 %v2002
    %v2198 = vunpack.c.l.b16 %v2003
    %v2199 = vunpack.c.h.b16 %v2003
    %v2200 = vunpack.c.l.b16 %v2004
    %v2201 = vunpack.c.h.b16 %v2004
    %v2202 = vunpack.c.l.b16 %v2005
    %v2203 = vunpack.c.h.b16 %v2005
    %v2204 = vpack.c.b16 %v2078, %v2076
    %v2205 = vpack.c.b16 %v2079, %v2077
    %v2206 = vpack.c.b16 %v2082, %v2080
    %v2207 = vpack.c.b16 %v2083, %v2081
    %v2208 = vpack.c.b16 %v2086, %v2084
    %v2209 = vpack.c.b16 %v2087, %v2085
    %v2210 = vpack.c.b16 %v2090, %v2088
    %v2211 = vpack.c.b16 %v2091, %v2089
    %v2212 = vpack.c.b16 %v2094, %v2092
    %v2213 = vpack.c.b16 %v2095, %v2093
    %v2214 = vpack.c.b16 %v2098, %v2096
    %v2215 = vpack.c.b16 %v2099, %v2097
    %v2216 = vpack.c.b16 %v2102, %v2100
    %v2217 = vpack.c.b16 %v2103, %v2101
    %v2218 = vpack.c.b16 %v2106, %v2104
    %v2219 = vpack.c.b16 %v2107, %v2105
    %v2220 = vpack.c.b16 %v2110, %v2108
    %v2221 = vpack.c.b16 %v2111, %v2109
    %v2222 = vpack.c.b16 %v2114, %v2112
    %v2223 = vpack.c.b16 %v2115, %v2113
    %v2224 = vpack.c.b16 %v2118, %v2116
    %v2225 = vpack.c.b16 %v2119, %v2117
    %v2226 = vpack.c.b16 %v2122, %v2120
    %v2227 = vpack.c.b16 %v2123, %v2121
    %v2228 = vpack.c.b16 %v2126, %v2124
    %v2229 = vpack.c.b16 %v2127, %v2125
    %v2230 = vpack.c.b16 %v2130, %v2128
    %v2231 = vpack.c.b16 %v2131, %v2129
    %v2232 = vpack.c.b16 %v2134, %v2132
    %v2233 = vpack.c.b16 %v2135, %v2133
    %v2234 = vpack.c.b16 %v2138, %v2136
    %v2235 = vpack.c.b16 %v2139, %v2137
    %v2236 = vpack.c.b16 %v2142, %v2140
    %v2237 = vpack.c.b16 %v2143, %v2141
    %v2238 = vpack.c.b16 %v2146, %v2144
    %v2239 = vpack.c.b16 %v2147, %v2145
    %v2240 = vpack.c.b16 %v2150, %v2148
    %v2241 = vpack.c.b16 %v2151, %v2149
    %v2242 = vpack.c.b16 %v2154, %v2152
    %v2243 = vpack.c.b16 %v2155, %v2153
    %v2244 = vpack.c.b16 %v2158, %v2156
    %v2245 = vpack.c.b16 %v2159, %v2157
    %v2246 = vpack.c.b16 %v2162, %v2160
    %v2247 = vpack.c.b16 %v2163, %v2161
    %v2248 = vpack.c.b16 %v2166, %v2164
    %v2249 = vpack.c.b16 %v2167, %v2165
    %v2250 = vpack.c.b16 %v2170, %v2168
    %v2251 = vpack.c.b16 %v2171, %v2169
    %v2252 = vpack.c.b16 %v2174, %v2172
    %v2253 = vpack.c.b16 %v2175, %v2173
    %v2254 = vpack.c.b16 %v2178, %v2176
    %v2255 = vpack.c.b16 %v2179, %v2177
    %v2256 = vpack.c.b16 %v2182, %v2180
    %v2257 = vpack.c.b16 %v2183, %v2181
    %v2258 = vpack.c.b16 %v2186, %v2184
    %v2259 = vpack.c.b16 %v2187, %v2185
    %v2260 = vpack.c.b16 %v2190, %v2188
    %v2261 = vpack.c.b16 %v2191, %v2189
    %v2262 = vpack.c.b16 %v2194, %v2192
    %v2263 = vpack.c.b16 %v2195, %v2193
    %v2264 = vpack.c.b16 %v2198, %v2196
    %v2265 = vpack.c.b16 %v2199, %v2197
    %v2266 = vpack.c.b16 %v2202, %v2200
    %v2267 = vpack.c.b16 %v2203, %v2201
    %2332 = vmatpush.bf16.msra.mxu0 %v2218
    %2333 = vmatpush.bf16.msra.mxu0 %v2216
    %2334 = vmatpush.bf16.msra.mxu0 %v2214
    %2335 = vmatpush.bf16.msra.mxu0 %v2212
    %2336 = vmatpush.bf16.msra.mxu0 %v2210
    %2337 = vmatpush.bf16.msra.mxu0 %v2208
    %2338 = vmatpush.bf16.msra.mxu0 %v2206
    %2339 = vmatpush.bf16.msra.mxu0 %v2204
    %2340 = vmatmul.bf16.gmra.mxu0 %v1938
    %v2341 = vpop.f32.mrf.mxu0
    %v2342 = vadd.f32 %v2008, %v2341
    %v2343 = vpop.f32.mrf.mxu0
    %v2344 = vadd.f32 %v2008, %v2343
    %2345 = vdwg.mxu0
    %2346 = vmatpush.bf16.msra.mxu0 %v2234
    %2347 = vmatpush.bf16.msra.mxu0 %v2232
    %2348 = vmatpush.bf16.msra.mxu0 %v2230
    %2349 = vmatpush.bf16.msra.mxu0 %v2228
    %2350 = vmatpush.bf16.msra.mxu0 %v2226
    %2351 = vmatpush.bf16.msra.mxu0 %v2224
    %2352 = vmatpush.bf16.msra.mxu0 %v2222
    %2353 = vmatpush.bf16.msra.mxu0 %v2220
    %2354 = vmatmul.bf16.gmra.mxu0 %v1939
    %v2355 = vpop.f32.mrf.mxu0
    %v2356 = vadd.f32 %v2342, %v2355
    %v2357 = vpop.f32.mrf.mxu0
    %v2358 = vadd.f32 %v2344, %v2357
    %2359 = vdwg.mxu0
    %2360 = vmatpush.bf16.msra.mxu0 %v2250
    %2361 = vmatpush.bf16.msra.mxu0 %v2248
    %2362 = vmatpush.bf16.msra.mxu0 %v2246
    %2363 = vmatpush.bf16.msra.mxu0 %v2244
    %2364 = vmatpush.bf16.msra.mxu0 %v2242
    %2365 = vmatpush.bf16.msra.mxu0 %v2240
    %2366 = vmatpush.bf16.msra.mxu0 %v2238
    %2367 = vmatpush.bf16.msra.mxu0 %v2236
    %2368 = vmatmul.bf16.gmra.mxu0 %v1940
    %v2369 = vpop.f32.mrf.mxu0
    %v2370 = vadd.f32 %v2356, %v2369
    %v2371 = vpop.f32.mrf.mxu0
    %v2372 = vadd.f32 %v2358, %v2371
    %2373 = vdwg.mxu0
    %2374 = vmatpush.bf16.msra.mxu0 %v2266
    %2375 = vmatpush.bf16.msra.mxu0 %v2264
    %2376 = vmatpush.bf16.msra.mxu0 %v2262
    %2377 = vmatpush.bf16.msra.mxu0 %v2260
    %2378 = vmatpush.bf16.msra.mxu0 %v2258
    %2379 = vmatpush.bf16.msra.mxu0 %v2256
    %2380 = vmatpush.bf16.msra.mxu0 %v2254
    %2381 = vmatpush.bf16.msra.mxu0 %v2252
    %2382 = vmatmul.bf16.gmra.mxu0 %v1941
    %v2383 = vpop.f32.mrf.mxu0
    %v2384 = vadd.f32 %v2370, %v2383
    %v2385 = vpop.f32.mrf.mxu0
    %v2386 = vadd.f32 %v2372, %v2385
    %2387 = vdwg.mxu0
    %2388 = vmatpush.bf16.msra.mxu0 %v2219
    %2389 = vmatpush.bf16.msra.mxu0 %v2217
    %2390 = vmatpush.bf16.msra.mxu0 %v2215
    %2391 = vmatpush.bf16.msra.mxu0 %v2213
    %2392 = vmatpush.bf16.msra.mxu0 %v2211
    %2393 = vmatpush.bf16.msra.mxu0 %v2209
    %2394 = vmatpush.bf16.msra.mxu0 %v2207
    %2395 = vmatpush.bf16.msra.mxu0 %v2205
    %2396 = vmatmul.bf16.gmra.mxu0 %v1938
    %v2397 = vpop.f32.mrf.mxu0
    %v2398 = vadd.f32 %v2009, %v2397
    %v2399 = vpop.f32.mrf.mxu0
    %v2400 = vadd.f32 %v2009, %v2399
    %2401 = vdwg.mxu0
    %2402 = vmatpush.bf16.msra.mxu0 %v2235
    %2403 = vmatpush.bf16.msra.mxu0 %v2233
    %2404 = vmatpush.bf16.msra.mxu0 %v2231
    %2405 = vmatpush.bf16.msra.mxu0 %v2229
    %2406 = vmatpush.bf16.msra.mxu0 %v2227
    %2407 = vmatpush.bf16.msra.mxu0 %v2225
    %2408 = vmatpush.bf16.msra.mxu0 %v2223
    %2409 = vmatpush.bf16.msra.mxu0 %v2221
    %2410 = vmatmul.bf16.gmra.mxu0 %v1939
    %v2411 = vpop.f32.mrf.mxu0
    %v2412 = vadd.f32 %v2398, %v2411
    %v2413 = vpop.f32.mrf.mxu0
    %v2414 = vadd.f32 %v2400, %v2413
    %2415 = vdwg.mxu0
    %2416 = vmatpush.bf16.msra.mxu0 %v2251
    %2417 = vmatpush.bf16.msra.mxu0 %v2249
    %2418 = vmatpush.bf16.msra.mxu0 %v2247
    %2419 = vmatpush.bf16.msra.mxu0 %v2245
    %2420 = vmatpush.bf16.msra.mxu0 %v2243
    %2421 = vmatpush.bf16.msra.mxu0 %v2241
    %2422 = vmatpush.bf16.msra.mxu0 %v2239
    %2423 = vmatpush.bf16.msra.mxu0 %v2237
    %2424 = vmatmul.bf16.gmra.mxu0 %v1940
    %v2425 = vpop.f32.mrf.mxu0
    %v2426 = vadd.f32 %v2412, %v2425
    %v2427 = vpop.f32.mrf.mxu0
    %v2428 = vadd.f32 %v2414, %v2427
    %2429 = vdwg.mxu0
    %2430 = vmatpush.bf16.msra.mxu0 %v2267
    %2431 = vmatpush.bf16.msra.mxu0 %v2265
    %2432 = vmatpush.bf16.msra.mxu0 %v2263
    %2433 = vmatpush.bf16.msra.mxu0 %v2261
    %2434 = vmatpush.bf16.msra.mxu0 %v2259
    %2435 = vmatpush.bf16.msra.mxu0 %v2257
    %2436 = vmatpush.bf16.msra.mxu0 %v2255
    %2437 = vmatpush.bf16.msra.mxu0 %v2253
    %2438 = vmatmul.bf16.gmra.mxu0 %v1941
    %v2439 = vpop.f32.mrf.mxu0
    %v2440 = vadd.f32 %v2426, %v2439
    %v2441 = vpop.f32.mrf.mxu0
    %v2442 = vadd.f32 %v2428, %v2441
    %2443 = vdwg.mxu0
    %v2444 = vtanh.pop %v2384
    %v2445 = vtanh.pop %v2440
    %v2446 = vtanh.pop %v2386
    %v2447 = vtanh.pop %v2442
    %v2448 = vpack.c.bf16 %v2445, %v2444
    %v2449 = vpack.c.bf16 %v2447, %v2446
    %2450 = vst [vmem:[%s14] sm:$0xff] %v2448
    %2451 = vst [vmem:[%s14 + $0x8] sm:$0xff] %v2449
    %2452 = vst [vmem:[%s15] sm:$0xff] %v1307
    %2453 = vst [vmem:[%s15 + $0x8] sm:$0xff] %v1309
    // Predicated region
    $region74: #{vae_forward.1} parent=1 // pred_check
      _
    $region75: #{vae_forward.1} parent=1 // pred_check_branch
      %2455 = sbr.rel (0) target = $region77
    $region76: #{vae_forward.1} parent=1 // pred_region
      _
    $region77: #{vae_forward.1} parent=1 // pred_fallthru
      _
    // Predicated region
    $region78: #{vae_forward.1} parent=1 // pred_check
      _
    $region79: #{vae_forward.1} parent=1 // pred_check_branch
      %2457 = sbr.rel (0) target = $region81
    $region80: #{vae_forward.1} parent=1 // pred_region
      _
    $region81: #{vae_forward.1} parent=1 // pred_fallthru
      _
    // Predicated region
    $region82: #{vae_forward.1} parent=1 // pred_check
      _
    $region83: #{vae_forward.1} parent=1 // pred_check_branch
      %2459 = sbr.rel (0) target = $region85
    $region84: #{vae_forward.1} parent=1 // pred_region
      _
    $region85: #{vae_forward.1} parent=1 // pred_fallthru
      _
    // Predicated region
    $region86: #{vae_forward.1} parent=1 // pred_check
      _
    $region87: #{vae_forward.1} parent=1 // pred_check_branch
      %2461 = sbr.rel (0) target = $region89
    $region88: #{vae_forward.1} parent=1 // pred_region
      _
    $region89: #{vae_forward.1} parent=1 // pred_fallthru
      _
    %2462 = vsyncpa [#allocation3], 1
    %2463 = vsyncpa [#allocation5], 1
    %2464 = vsyncpa [#allocation8], 1

</llo_original>
